<compile_context>
chip_gen: v7x
topology: tpu7x:2x2x1
jax: 0.10.0
libtpu: 0.0.40
codegen_flags: <defaults>
</compile_context>

<pallas_src>
import jax
import jax.numpy as jnp
from jax.experimental import pallas as pl
from jax.experimental.pallas import tpu as pltpu

D = 256        # stand-in hidden size (real model: 768); multiple of 128
H = 128        # stand-in fc1 output  (real model: 384); multiple of 128
C = 3          # num_classes
EPS_L2 = 1e-12 # torch.nn.functional.normalize eps
EPS_IN = 1e-5  # InstanceNorm1d eps


def _mm(x, w):
    # x @ w, with w already in MXU-native [in, out] layout.  bf16 operands,
    # f32 accumulation on the MXU.
    return jnp.dot(x.astype(w.dtype), w, preferred_element_type=jnp.float32)


def _l2_normalize(x):
    # F.normalize(p=2): x / max(||x||, eps)  ==  x * rsqrt(max(||x||^2, eps^2))
    # (rsqrt goes to the EUP slot; cheaper than sqrt + divide on the VPU).
    n2 = jnp.sum(x * x, axis=1, keepdims=True)
    return x * jax.lax.rsqrt(jnp.maximum(n2, EPS_L2 * EPS_L2))


def fusion_head_kernel(f_ref, q_ref, o_ref,
                       ut_ref, vt_ref, wcomb_ref, bcomb_ref,
                       w1t_ref, b1_ref,
                       out_ref):
    # ---- elementwise prologue in f32 ----
    f = _l2_normalize(f_ref[...])            # normalize(frame_features)
    qn = _l2_normalize(q_ref[...])           # normalize(question pooler output)
    on = _l2_normalize(o_ref[...])           # normalize(mean of option pooler outputs)

    x_visual = _mm(f, ut_ref[...])           # x1 @ U.T
    x_text = _mm(qn + on, vt_ref[...])       # (x_text + x_text2) @ V.T
    xvt = x_visual * jax.nn.sigmoid(x_text)  # gated fusion (f32)

    # nn.MultiheadAttention with sequence length 1: the per-head softmax is
    # over a single key and equals exactly 1, so the attention output reduces
    # to out_proj(v_proj(x)); the q/k projections and 1/sqrt(d_head) scale
    # cancel.  That chain plus `relu(. @ W.T)` is pre-fused at trace time into
    # a single matmul with Wcomb = W @ Wo @ Wv, bcomb = (bv @ Wo.T + bo) @ W.T.
    h = jnp.maximum(_mm(xvt, wcomb_ref[...]) + bcomb_ref[...], 0.0)

    h = _mm(h, w1t_ref[...]) + b1_ref[...]   # fc1

    # InstanceNorm1d on a (1, H) sample == zero-mean / unit-var over features,
    # no affine params, biased variance.  dropout(p=0.3) is identity in eval.
    mu = jnp.mean(h, axis=1, keepdims=True)
    var = jnp.mean((h - mu) ** 2, axis=1, keepdims=True)
    out_ref[...] = (h - mu) * jax.lax.rsqrt(var + EPS_IN)


def vqa_fusion_forward(frame_rows, q_rows, o_rows, params):
    """Pallas fusion head + XLA classifier.  Returns (num_questions, C) logits."""
    n = frame_rows.shape[0]

    # Fill the MXU M dimension; use 256-row tiles when the batch is big enough
    # to still leave >= 2 grid steps (so the "parallel" axis can be split
    # across both v7x TensorCores).
    qb = 256 if n >= 512 else 128
    pad = (-n) % qb
    if pad:
        def z(x):
            return jnp.concatenate(
                [x, jnp.zeros((pad, x.shape[1]), x.dtype)], axis=0)
        frame_rows, q_rows, o_rows = z(frame_rows), z(q_rows), z(o_rows)
    qp = frame_rows.shape[0]

    # ---- trace-time weight preparation (runs once in XLA, not per step) ----
    # Fuse seq-len-1 attention (v_proj -> out_proj) and W into one linear.
    w_comb = params["W"] @ params["Wo"] @ params["Wv"]                        # [D, D]
    b_comb = (params["bv"] @ params["Wo"].T + params["bo"]) @ params["W"].T   # [1, D]
    # MXU-native [in, out] layout, bf16 matmul operands; biases stay f32 and
    # are added after the f32 accumulation.
    ut = params["U"].T.astype(jnp.bfloat16)            # [D, D]
    vt = params["V"].T.astype(jnp.bfloat16)            # [D, D]
    wcomb_t = w_comb.T.astype(jnp.bfloat16)            # [D, D]
    w1t = params["W1"].T.astype(jnp.bfloat16)          # [D, H]
    b_comb = b_comb.astype(jnp.float32)                # [1, D]
    b1 = params["b1"].astype(jnp.float32)              # [1, H]

    row_spec = pl.BlockSpec((qb, D), lambda i: (i, 0))

    def full(shape):
        return pl.BlockSpec(shape, lambda i: (0, 0))

    feats = pl.pallas_call(
        fusion_head_kernel,
        out_shape=jax.ShapeDtypeStruct((qp, H), jnp.float32),
        grid_spec=pltpu.PrefetchScalarGridSpec(
            num_scalar_prefetch=0,
            grid=(qp // qb,),
            in_specs=[row_spec, row_spec, row_spec,
                      full((D, D)), full((D, D)), full((D, D)), full((1, D)),
                      full((D, H)), full((1, H))],
            out_specs=pl.BlockSpec((qb, H), lambda i: (i, 0)),
        ),
        compiler_params=pltpu.CompilerParams(
            dimension_semantics=("parallel",),
            vmem_limit_bytes=48 * 1024 * 1024),
    )(frame_rows, q_rows, o_rows, ut, vt, wcomb_t, b_comb, w1t, b1)

    # Classifier (C = 3 output lanes) stays in XLA: emitting a 3-lane output
    # from the kernel would force masked partial stores and a padding-dominated
    # writeback DMA for negligible FLOPs.
    feats = feats[:n]
    return feats @ params["Wc"].T + params["bc"]


def init_params(key):
    # Deterministic synthetic init (kaiming/linear-style uniform bounds).
    ks = jax.random.split(key, 9)

    def u(k, shape, fan_in):
        b = 1.0 / jnp.sqrt(float(fan_in))
        return jax.random.uniform(k, shape, jnp.float32, -b, b)

    return dict(
        U=u(ks[0], (D, D), D),
        V=u(ks[1], (D, D), D),
        W=u(ks[2], (D, D), D),
        Wv=u(ks[3], (D, D), D), bv=jnp.zeros((1, D), jnp.float32),
        Wo=u(ks[4], (D, D), D), bo=jnp.zeros((1, D), jnp.float32),
        W1=u(ks[5], (H, D), D), b1=u(ks[6], (1, H), D),
        Wc=u(ks[7], (C, H), H), bc=u(ks[8], (1, C), H),
    )


if __name__ == "__main__":
    key = jax.random.PRNGKey(0)
    pkey, dkey = jax.random.split(key)
    params = init_params(pkey)

    batch = 2
    n_questions = [4, 4]
    n_chunks = [2, 3]   # each chunk of 32 frames -> one Timesformer mean embedding

    # TODO(synk): the Timesformer/BERT backbones, tokenizer and image processor
    # are external pretrained HF components; their pooled embeddings are
    # synthesized deterministically here instead of being computed.
    keys = jax.random.split(dkey, 3)
    kf = jax.random.split(keys[0], batch)
    kq = jax.random.split(keys[1], batch)
    ko = jax.random.split(keys[2], batch)

    frame_rows_list, q_rows_list, o_rows_list = [], [], []
    for b in range(batch):
        chunk_emb = jax.random.normal(kf[b], (n_chunks[b], D), jnp.float32)
        # running mean over chunks == plain mean of chunk embeddings
        frame_feat = jnp.mean(chunk_emb, axis=0, keepdims=True)
        q_feats = jax.random.normal(kq[b], (n_questions[b], D), jnp.float32)
        opt_feats = jnp.mean(
            jax.random.normal(ko[b], (n_questions[b], 3, D), jnp.float32), axis=1)
        frame_rows_list.append(jnp.repeat(frame_feat, n_questions[b], axis=0))
        q_rows_list.append(q_feats)
        o_rows_list.append(opt_feats)

    frame_rows = jnp.concatenate(frame_rows_list, axis=0)
    q_rows = jnp.concatenate(q_rows_list, axis=0)
    o_rows = jnp.concatenate(o_rows_list, axis=0)
    total_q = frame_rows.shape[0]

    logits_tensor = vqa_fusion_forward(frame_rows, q_rows, o_rows, params)
    logits_tensor = jax.block_until_ready(logits_tensor)

    # Rebuild the (all_batch_logits, logits_tensor) return structure.
    all_batch_logits, off = [], 0
    for b in range(batch):
        all_batch_logits.append([logits_tensor[off:off + n_questions[b]]])
        off += n_questions[b]

    assert logits_tensor.shape == (total_q, C)
    assert all(len(x) == 1 for x in all_batch_logits)
    assert bool(jnp.all(jnp.isfinite(logits_tensor)))
    print("KERNEL_OK")
</pallas_src>

<mosaic_0001>
module attributes {stable_mosaic.version = 11 : i64} {
  func.func @fusion_head_kernel(%arg0: i32, %arg1: memref<128x256xf32, #tpu.memory_space<vmem>>, %arg2: memref<128x256xf32, #tpu.memory_space<vmem>>, %arg3: memref<128x256xf32, #tpu.memory_space<vmem>>, %arg4: memref<256x256xbf16, #tpu.memory_space<vmem>>, %arg5: memref<256x256xbf16, #tpu.memory_space<vmem>>, %arg6: memref<256x256xbf16, #tpu.memory_space<vmem>>, %arg7: memref<1x256xf32, #tpu.memory_space<vmem>>, %arg8: memref<256x128xbf16, #tpu.memory_space<vmem>>, %arg9: memref<1x128xf32, #tpu.memory_space<vmem>>, %arg10: memref<128x128xf32, #tpu.memory_space<vmem>>) attributes {dimension_semantics = [#tpu.dimension_semantics<parallel>], iteration_bounds = array<i64: 1>, scalar_prefetch = 0 : i64, scratch_operands = 0 : i64, tpu.core_type = #tpu.core_type<tc>, window_params = [{transform_indices = @transform_0, window_bounds = array<i64: 128, 256>}, {transform_indices = @transform_1, window_bounds = array<i64: 128, 256>}, {transform_indices = @transform_2, window_bounds = array<i64: 128, 256>}, {pipeline_mode = #tpu.pipeline_mode<synchronous>, transform_indices = @transform_3, window_bounds = array<i64: 256, 256>}, {pipeline_mode = #tpu.pipeline_mode<synchronous>, transform_indices = @transform_4, window_bounds = array<i64: 256, 256>}, {pipeline_mode = #tpu.pipeline_mode<synchronous>, transform_indices = @transform_5, window_bounds = array<i64: 256, 256>}, {pipeline_mode = #tpu.pipeline_mode<synchronous>, transform_indices = @transform_6, window_bounds = array<i64: 1, 256>}, {pipeline_mode = #tpu.pipeline_mode<synchronous>, transform_indices = @transform_7, window_bounds = array<i64: 256, 128>}, {pipeline_mode = #tpu.pipeline_mode<synchronous>, transform_indices = @transform_8, window_bounds = array<i64: 1, 128>}, {transform_indices = @transform_9, window_bounds = array<i64: 128, 128>}]} {
    %c0 = arith.constant 0 : index
    %c0_0 = arith.constant 0 : index
    %0 = vector.load %arg1[%c0, %c0_0] : memref<128x256xf32, #tpu.memory_space<vmem>>, vector<128x256xf32>
    %1 = arith.mulf %0, %0 : vector<128x256xf32>
    %cst = arith.constant dense<0.000000e+00> : vector<128xf32>
    %2 = vector.multi_reduction <add>, %1, %cst [1] : vector<128x256xf32> to vector<128xf32>
    %3 = vector.shape_cast %2 : vector<128xf32> to vector<128x1xf32>
    %cst_1 = arith.constant 1.000000e-24 : f32
    %4 = vector.broadcast %cst_1 : f32 to vector<128x1xf32>
    %5 = arith.maximumf %3, %4 : vector<128x1xf32>
    %6 = math.rsqrt %5 : vector<128x1xf32>
    %7 = vector.broadcast %6 : vector<128x1xf32> to vector<128x256xf32>
    %8 = arith.mulf %0, %7 : vector<128x256xf32>
    %c0_2 = arith.constant 0 : index
    %c0_3 = arith.constant 0 : index
    %9 = vector.load %arg2[%c0_2, %c0_3] : memref<128x256xf32, #tpu.memory_space<vmem>>, vector<128x256xf32>
    %10 = arith.mulf %9, %9 : vector<128x256xf32>
    %cst_4 = arith.constant dense<0.000000e+00> : vector<128xf32>
    %11 = vector.multi_reduction <add>, %10, %cst_4 [1] : vector<128x256xf32> to vector<128xf32>
    %12 = vector.shape_cast %11 : vector<128xf32> to vector<128x1xf32>
    %cst_5 = arith.constant 1.000000e-24 : f32
    %13 = vector.broadcast %cst_5 : f32 to vector<128x1xf32>
    %14 = arith.maximumf %12, %13 : vector<128x1xf32>
    %15 = math.rsqrt %14 : vector<128x1xf32>
    %16 = vector.broadcast %15 : vector<128x1xf32> to vector<128x256xf32>
    %17 = arith.mulf %9, %16 : vector<128x256xf32>
    %c0_6 = arith.constant 0 : index
    %c0_7 = arith.constant 0 : index
    %18 = vector.load %arg3[%c0_6, %c0_7] : memref<128x256xf32, #tpu.memory_space<vmem>>, vector<128x256xf32>
    %19 = arith.mulf %18, %18 : vector<128x256xf32>
    %cst_8 = arith.constant dense<0.000000e+00> : vector<128xf32>
    %20 = vector.multi_reduction <add>, %19, %cst_8 [1] : vector<128x256xf32> to vector<128xf32>
    %21 = vector.shape_cast %20 : vector<128xf32> to vector<128x1xf32>
    %cst_9 = arith.constant 1.000000e-24 : f32
    %22 = vector.broadcast %cst_9 : f32 to vector<128x1xf32>
    %23 = arith.maximumf %21, %22 : vector<128x1xf32>
    %24 = math.rsqrt %23 : vector<128x1xf32>
    %25 = vector.broadcast %24 : vector<128x1xf32> to vector<128x256xf32>
    %26 = arith.mulf %18, %25 : vector<128x256xf32>
    %c0_10 = arith.constant 0 : index
    %c0_11 = arith.constant 0 : index
    %27 = vector.load %arg4[%c0_10, %c0_11] : memref<256x256xbf16, #tpu.memory_space<vmem>>, vector<256x256xbf16>
    %28 = arith.truncf %8 : vector<128x256xf32> to vector<128x256xbf16>
    %cst_12 = arith.constant dense<0.000000e+00> : vector<128x256xf32>
    %29 = tpu.matmul %28, %27, %cst_12 {dimension_numbers = #tpu.dot_dimension_numbers<[1], [0], [0], [1], [0, 0, 1, 1], [], []>} : vector<128x256xbf16>, vector<256x256xbf16>, vector<128x256xf32> -> vector<128x256xf32>
    %30 = arith.addf %17, %26 : vector<128x256xf32>
    %c0_13 = arith.constant 0 : index
    %c0_14 = arith.constant 0 : index
    %31 = vector.load %arg5[%c0_13, %c0_14] : memref<256x256xbf16, #tpu.memory_space<vmem>>, vector<256x256xbf16>
    %32 = arith.truncf %30 : vector<128x256xf32> to vector<128x256xbf16>
    %cst_15 = arith.constant dense<0.000000e+00> : vector<128x256xf32>
    %33 = tpu.matmul %32, %31, %cst_15 {dimension_numbers = #tpu.dot_dimension_numbers<[1], [0], [0], [1], [0, 0, 1, 1], [], []>} : vector<128x256xbf16>, vector<256x256xbf16>, vector<128x256xf32> -> vector<128x256xf32>
    %34 = arith.negf %33 : vector<128x256xf32>
    %35 = math.exp %34 : vector<128x256xf32>
    %cst_16 = arith.constant 1.000000e+00 : f32
    %36 = vector.broadcast %cst_16 : f32 to vector<128x256xf32>
    %37 = arith.addf %36, %35 : vector<128x256xf32>
    %38 = arith.divf %36, %37 : vector<128x256xf32>
    %39 = arith.mulf %29, %38 : vector<128x256xf32>
    %c0_17 = arith.constant 0 : index
    %c0_18 = arith.constant 0 : index
    %40 = vector.load %arg6[%c0_17, %c0_18] : memref<256x256xbf16, #tpu.memory_space<vmem>>, vector<256x256xbf16>
    %41 = arith.truncf %39 : vector<128x256xf32> to vector<128x256xbf16>
    %cst_19 = arith.constant dense<0.000000e+00> : vector<128x256xf32>
    %42 = tpu.matmul %41, %40, %cst_19 {dimension_numbers = #tpu.dot_dimension_numbers<[1], [0], [0], [1], [0, 0, 1, 1], [], []>} : vector<128x256xbf16>, vector<256x256xbf16>, vector<128x256xf32> -> vector<128x256xf32>
    %c0_20 = arith.constant 0 : index
    %c0_21 = arith.constant 0 : index
    %43 = vector.load %arg7[%c0_20, %c0_21] : memref<1x256xf32, #tpu.memory_space<vmem>>, vector<1x256xf32>
    %44 = vector.broadcast %43 : vector<1x256xf32> to vector<128x256xf32>
    %45 = arith.addf %42, %44 : vector<128x256xf32>
    %cst_22 = arith.constant 0.000000e+00 : f32
    %46 = vector.broadcast %cst_22 : f32 to vector<128x256xf32>
    %47 = arith.maximumf %45, %46 : vector<128x256xf32>
    %c0_23 = arith.constant 0 : index
    %c0_24 = arith.constant 0 : index
    %48 = vector.load %arg8[%c0_23, %c0_24] : memref<256x128xbf16, #tpu.memory_space<vmem>>, vector<256x128xbf16>
    %49 = arith.truncf %47 : vector<128x256xf32> to vector<128x256xbf16>
    %cst_25 = arith.constant dense<0.000000e+00> : vector<128x128xf32>
    %50 = tpu.matmul %49, %48, %cst_25 {dimension_numbers = #tpu.dot_dimension_numbers<[1], [0], [0], [1], [0, 0, 1, 1], [], []>} : vector<128x256xbf16>, vector<256x128xbf16>, vector<128x128xf32> -> vector<128x128xf32>
    %c0_26 = arith.constant 0 : index
    %c0_27 = arith.constant 0 : index
    %51 = vector.load %arg9[%c0_26, %c0_27] : memref<1x128xf32, #tpu.memory_space<vmem>>, vector<1x128xf32>
    %52 = vector.broadcast %51 : vector<1x128xf32> to vector<128x128xf32>
    %53 = arith.addf %50, %52 : vector<128x128xf32>
    %cst_28 = arith.constant dense<0.000000e+00> : vector<128xf32>
    %54 = vector.multi_reduction <add>, %53, %cst_28 [1] : vector<128x128xf32> to vector<128xf32>
    %55 = vector.shape_cast %54 : vector<128xf32> to vector<128x1xf32>
    %cst_29 = arith.constant 1.280000e+02 : f32
    %56 = vector.broadcast %cst_29 : f32 to vector<128x1xf32>
    %57 = arith.divf %55, %56 : vector<128x1xf32>
    %58 = vector.broadcast %57 : vector<128x1xf32> to vector<128x128xf32>
    %59 = arith.subf %53, %58 : vector<128x128xf32>
    %60 = arith.mulf %59, %59 : vector<128x128xf32>
    %cst_30 = arith.constant dense<0.000000e+00> : vector<128xf32>
    %61 = vector.multi_reduction <add>, %60, %cst_30 [1] : vector<128x128xf32> to vector<128xf32>
    %62 = vector.shape_cast %61 : vector<128xf32> to vector<128x1xf32>
    %cst_31 = arith.constant 1.280000e+02 : f32
    %63 = vector.broadcast %cst_31 : f32 to vector<128x1xf32>
    %64 = arith.divf %62, %63 : vector<128x1xf32>
    %65 = vector.broadcast %57 : vector<128x1xf32> to vector<128x128xf32>
    %66 = arith.subf %53, %65 : vector<128x128xf32>
    %cst_32 = arith.constant 9.99999974E-6 : f32
    %67 = vector.broadcast %cst_32 : f32 to vector<128x1xf32>
    %68 = arith.addf %64, %67 : vector<128x1xf32>
    %69 = math.rsqrt %68 : vector<128x1xf32>
    %70 = vector.broadcast %69 : vector<128x1xf32> to vector<128x128xf32>
    %71 = arith.mulf %66, %70 : vector<128x128xf32>
    %c0_33 = arith.constant 0 : index
    %c0_34 = arith.constant 0 : index
    %72 = vector.load %arg10[%c0_33, %c0_34] : memref<128x128xf32, #tpu.memory_space<vmem>>, vector<128x128xf32>
    tpu.vector_store %arg10[%c0_33, %c0_34], %71 {strides = array<i32>} : memref<128x128xf32, #tpu.memory_space<vmem>>, vector<128x128xf32>,
    return
  }
  func.func @transform_0(%arg0: i32) -> (i32, i32) {
    %c0_i32 = arith.constant 0 : i32
    %c0_i32_0 = arith.constant 0 : i32
    return %arg0, %c0_i32 : i32, i32
  }
  func.func @transform_1(%arg0: i32) -> (i32, i32) {
    %c0_i32 = arith.constant 0 : i32
    %c0_i32_0 = arith.constant 0 : i32
    return %arg0, %c0_i32 : i32, i32
  }
  func.func @transform_2(%arg0: i32) -> (i32, i32) {
    %c0_i32 = arith.constant 0 : i32
    %c0_i32_0 = arith.constant 0 : i32
    return %arg0, %c0_i32 : i32, i32
  }
  func.func @transform_3(%arg0: i32) -> (i32, i32) {
    %c0_i32 = arith.constant 0 : i32
    %c0_i32_0 = arith.constant 0 : i32
    %c0_i32_1 = arith.constant 0 : i32
    return %c0_i32, %c0_i32_0 : i32, i32
  }
  func.func @transform_4(%arg0: i32) -> (i32, i32) {
    %c0_i32 = arith.constant 0 : i32
    %c0_i32_0 = arith.constant 0 : i32
    %c0_i32_1 = arith.constant 0 : i32
    return %c0_i32, %c0_i32_0 : i32, i32
  }
  func.func @transform_5(%arg0: i32) -> (i32, i32) {
    %c0_i32 = arith.constant 0 : i32
    %c0_i32_0 = arith.constant 0 : i32
    %c0_i32_1 = arith.constant 0 : i32
    return %c0_i32, %c0_i32_0 : i32, i32
  }
  func.func @transform_6(%arg0: i32) -> (i32, i32) {
    %c0_i32 = arith.constant 0 : i32
    %c0_i32_0 = arith.constant 0 : i32
    %c0_i32_1 = arith.constant 0 : i32
    return %c0_i32, %c0_i32_0 : i32, i32
  }
  func.func @transform_7(%arg0: i32) -> (i32, i32) {
    %c0_i32 = arith.constant 0 : i32
    %c0_i32_0 = arith.constant 0 : i32
    %c0_i32_1 = arith.constant 0 : i32
    return %c0_i32, %c0_i32_0 : i32, i32
  }
  func.func @transform_8(%arg0: i32) -> (i32, i32) {
    %c0_i32 = arith.constant 0 : i32
    %c0_i32_0 = arith.constant 0 : i32
    %c0_i32_1 = arith.constant 0 : i32
    return %c0_i32, %c0_i32_0 : i32, i32
  }
  func.func @transform_9(%arg0: i32) -> (i32, i32) {
    %c0_i32 = arith.constant 0 : i32
    %c0_i32_0 = arith.constant 0 : i32
    return %arg0, %c0_i32 : i32, i32
  }
}

</mosaic_0001>

<llo_original>
// kernel: tpu_custom_call.1
$region0: #{tpu_custom_call.1}
  #allocation0 [shape = 'u32[]', space=smem, size = 0x4, offset = 0x4, fixed_abs, tag = 'smem constant byte address 0x4 - core index']
  #allocation1 [shape = 'u32[144,128]{1,0:T(1,128)}', space=vmem, size = 0x12000, scoped, tag = 'internal scratch']
  %s0 = inlined_call_operand.hbm [shape: f32[128,256], index: 0, kind: input, shape index: {}]
  %s1 = inlined_call_operand.hbm [shape: f32[128,256], index: 1, kind: input, shape index: {}]
  %s2 = inlined_call_operand.hbm [shape: f32[128,256], index: 2, kind: input, shape index: {}]
  %s3 = inlined_call_operand.hbm [shape: bf16[256,256], index: 3, kind: input, shape index: {}]
  %s4 = inlined_call_operand.hbm [shape: bf16[256,256], index: 4, kind: input, shape index: {}]
  %s5 = inlined_call_operand.hbm [shape: bf16[256,256], index: 5, kind: input, shape index: {}]
  %s6 = inlined_call_operand.vmem [shape: f32[1,256], index: 6, kind: input, shape index: {}]
  %s7 = inlined_call_operand.hbm [shape: bf16[256,128], index: 7, kind: input, shape index: {}]
  %s8 = inlined_call_operand.vmem [shape: f32[1,128], index: 8, kind: input, shape index: {}]
  %s9 = inlined_call_operand.hbm [shape: f32[128,128], index: 9, kind: output, shape index: {}]
  %s10 = sld [smem:[#allocation0]]
  $region74: #{tpu_custom_call.1} parent=0
    _
  %s12 = ssub.s32 1, %s10
  %s13 = scalar_select 0, %s12, %s10
  $region1: #{tpu_custom_call.1} parent=0
    #allocation2 [shape = 'u8[131072]{0}', space=vmem, size = 0x20000, scoped, tag = 'input window, operand 0, single buffered']
    #allocation3 [shape = 's32[1]{0}', space=sflag, size = 0x4, scoped, tag = 'scoped memory for tpu_custom_call.1']
    #allocation4 [shape = 's32[1]{0}', space=sflag, size = 0x4, scoped, tag = 'scoped memory for tpu_custom_call.1']
    #allocation5 [shape = 'u8[131072]{0}', space=vmem, size = 0x20000, scoped, tag = 'input window, operand 1, single buffered']
    #allocation6 [shape = 's32[1]{0}', space=sflag, size = 0x4, scoped, tag = 'scoped memory for tpu_custom_call.1']
    #allocation7 [shape = 'u8[131072]{0}', space=vmem, size = 0x20000, scoped, tag = 'input window, operand 2, single buffered']
    #allocation8 [shape = 'u8[131072]{0}', space=vmem, size = 0x20000, scoped, tag = 'input window, operand 3, single buffered']
    #allocation9 [shape = 's32[1]{0}', space=sflag, size = 0x4, scoped, tag = 'scoped memory for tpu_custom_call.1']
    #allocation10 [shape = 'u8[131072]{0}', space=vmem, size = 0x20000, scoped, tag = 'input window, operand 4, single buffered']
    #allocation11 [shape = 'u8[131072]{0}', space=vmem, size = 0x20000, scoped, tag = 'input window, operand 5, single buffered']
    #allocation12 [shape = 's32[1]{0}', space=sflag, size = 0x4, scoped, tag = 'scoped memory for tpu_custom_call.1']
    #allocation13 [shape = 'u8[65536]{0}', space=vmem, size = 0x10000, scoped, tag = 'input window, operand 7, single buffered']
    #allocation14 [shape = 'u8[65536]{0}', space=vmem, size = 0x10000, scoped, tag = 'output window, operand 0, single buffered']
    %14 = vsyncpa [#allocation3], 0
    %15 = vsyncpa [#allocation6], 0
    %16 = vsyncpa [#allocation9], 0
    %17 = vsyncpa [#allocation12], 0
    %18 = vsyncpa [#allocation4], 0
    // Predicated region
    $region2: #{tpu_custom_call.1} parent=1 // pred_check
      _
    $region3: #{tpu_custom_call.1} parent=1 // pred_check_branch
      %20 = sbr.rel (0) target = $region5
    $region4: #{tpu_custom_call.1} parent=1 // pred_region
      %s22 = ssub.s32 4096, 4096
      %23 = vsyncadd [#allocation3], %s22
      %s24 = sshll.u32 [#allocation2], 4
      %s25 = int_to_ptr.vmem [resolvable:$true] %s24
      %30 = dma.hbm_to_vmem [thread:$0]  %s0, 4096, %s25, [#allocation3], 256, 256, 16
    $region5: #{tpu_custom_call.1} parent=1 // pred_fallthru
      _
    // Predicated region
    $region6: #{tpu_custom_call.1} parent=1 // pred_check
      _
    $region7: #{tpu_custom_call.1} parent=1 // pred_check_branch
      %32 = sbr.rel (0) target = $region9
    $region8: #{tpu_custom_call.1} parent=1 // pred_region
      %s34 = ssub.s32 4096, 4096
      %35 = vsyncadd [#allocation6], %s34
      %s36 = sshll.u32 [#allocation5], 4
      %s37 = int_to_ptr.vmem [resolvable:$true] %s36
      %42 = dma.hbm_to_vmem [thread:$0]  %s1, 4096, %s37, [#allocation6], 256, 256, 16
    $region9: #{tpu_custom_call.1} parent=1 // pred_fallthru
      _
    // Predicated region
    $region10: #{tpu_custom_call.1} parent=1 // pred_check
      _
    $region11: #{tpu_custom_call.1} parent=1 // pred_check_branch
      %44 = sbr.rel (0) target = $region13
    $region12: #{tpu_custom_call.1} parent=1 // pred_region
      %s46 = ssub.s32 4096, 4096
      %47 = vsyncadd [#allocation6], %s46
      %s48 = sshll.u32 [#allocation7], 4
      %s49 = int_to_ptr.vmem [resolvable:$true] %s48
      %54 = dma.hbm_to_vmem [thread:$0]  %s2, 4096, %s49, [#allocation6], 256, 256, 16
    $region13: #{tpu_custom_call.1} parent=1 // pred_fallthru
      _
    // Predicated region
    $region14: #{tpu_custom_call.1} parent=1 // pred_check
      _
    $region15: #{tpu_custom_call.1} parent=1 // pred_check_branch
      %56 = sbr.rel (0) target = $region17
    $region16: #{tpu_custom_call.1} parent=1 // pred_region
      %s58 = ssub.s32 4096, 4096
      %59 = vsyncadd [#allocation9], %s58
      %s60 = sshll.u32 [#allocation8], 4
      %s61 = int_to_ptr.vmem [resolvable:$true] %s60
      %66 = dma.hbm_to_vmem [thread:$0]  %s3, 4096, %s61, [#allocation9], 128, 128, 8
    $region17: #{tpu_custom_call.1} parent=1 // pred_fallthru
      _
    // Predicated region
    $region18: #{tpu_custom_call.1} parent=1 // pred_check
      _
    $region19: #{tpu_custom_call.1} parent=1 // pred_check_branch
      %68 = sbr.rel (0) target = $region21
    $region20: #{tpu_custom_call.1} parent=1 // pred_region
      %s70 = ssub.s32 4096, 4096
      %71 = vsyncadd [#allocation9], %s70
      %s72 = sshll.u32 [#allocation10], 4
      %s73 = int_to_ptr.vmem [resolvable:$true] %s72
      %78 = dma.hbm_to_vmem [thread:$0]  %s4, 4096, %s73, [#allocation9], 128, 128, 8
    $region21: #{tpu_custom_call.1} parent=1 // pred_fallthru
      _
    // Predicated region
    $region22: #{tpu_custom_call.1} parent=1 // pred_check
      _
    $region23: #{tpu_custom_call.1} parent=1 // pred_check_branch
      %80 = sbr.rel (0) target = $region25
    $region24: #{tpu_custom_call.1} parent=1 // pred_region
      %s82 = ssub.s32 4096, 4096
      %83 = vsyncadd [#allocation12], %s82
      %s84 = sshll.u32 [#allocation11], 4
      %s85 = int_to_ptr.vmem [resolvable:$true] %s84
      %90 = dma.hbm_to_vmem [thread:$0]  %s5, 4096, %s85, [#allocation12], 128, 128, 8
    $region25: #{tpu_custom_call.1} parent=1 // pred_fallthru
      _
    // Predicated region
    $region26: #{tpu_custom_call.1} parent=1 // pred_check
      _
    $region27: #{tpu_custom_call.1} parent=1 // pred_check_branch
      %92 = sbr.rel (0) target = $region29
    $region28: #{tpu_custom_call.1} parent=1 // pred_region
      _
    $region29: #{tpu_custom_call.1} parent=1 // pred_fallthru
      _
    // Predicated region
    $region30: #{tpu_custom_call.1} parent=1 // pred_check
      _
    $region31: #{tpu_custom_call.1} parent=1 // pred_check_branch
      %94 = sbr.rel (0) target = $region33
    $region32: #{tpu_custom_call.1} parent=1 // pred_region
      %s96 = ssub.s32 2048, 2048
      %97 = vsyncadd [#allocation12], %s96
      %s98 = sshll.u32 [#allocation13], 4
      %s99 = int_to_ptr.vmem [resolvable:$true] %s98
      %104 = dma.hbm_to_vmem [thread:$0]  %s7, 2048, %s99, [#allocation12], 64, 64, 4
    $region33: #{tpu_custom_call.1} parent=1 // pred_fallthru
      _
    // Predicated region
    $region34: #{tpu_custom_call.1} parent=1 // pred_check
      _
    $region35: #{tpu_custom_call.1} parent=1 // pred_check_branch
      %106 = sbr.rel (0) target = $region37
    $region36: #{tpu_custom_call.1} parent=1 // pred_region
      _
    $region37: #{tpu_custom_call.1} parent=1 // pred_fallthru
      _
    // Predicated region
    $region38: #{tpu_custom_call.1} parent=1 // pred_check
      _
    $region39: #{tpu_custom_call.1} parent=1 // pred_check_branch
      %108 = sbr.rel (0) target = $region41
    $region40: #{tpu_custom_call.1} parent=1 // pred_region
      %109 = dma.done [#allocation3], 4096
    $region41: #{tpu_custom_call.1} parent=1 // pred_fallthru
      _
    // Predicated region
    $region42: #{tpu_custom_call.1} parent=1 // pred_check
      _
    $region43: #{tpu_custom_call.1} parent=1 // pred_check_branch
      %111 = sbr.rel (0) target = $region45
    $region44: #{tpu_custom_call.1} parent=1 // pred_region
      %112 = dma.done [#allocation6], 4096
    $region45: #{tpu_custom_call.1} parent=1 // pred_fallthru
      _
    // Predicated region
    $region46: #{tpu_custom_call.1} parent=1 // pred_check
      _
    $region47: #{tpu_custom_call.1} parent=1 // pred_check_branch
      %114 = sbr.rel (0) target = $region49
    $region48: #{tpu_custom_call.1} parent=1 // pred_region
      %115 = dma.done [#allocation6], 4096
    $region49: #{tpu_custom_call.1} parent=1 // pred_fallthru
      _
    // Predicated region
    $region50: #{tpu_custom_call.1} parent=1 // pred_check
      _
    $region51: #{tpu_custom_call.1} parent=1 // pred_check_branch
      %117 = sbr.rel (0) target = $region53
    $region52: #{tpu_custom_call.1} parent=1 // pred_region
      %118 = dma.done [#allocation9], 4096
    $region53: #{tpu_custom_call.1} parent=1 // pred_fallthru
      _
    // Predicated region
    $region54: #{tpu_custom_call.1} parent=1 // pred_check
      _
    $region55: #{tpu_custom_call.1} parent=1 // pred_check_branch
      %120 = sbr.rel (0) target = $region57
    $region56: #{tpu_custom_call.1} parent=1 // pred_region
      %121 = dma.done [#allocation9], 4096
    $region57: #{tpu_custom_call.1} parent=1 // pred_fallthru
      _
    // Predicated region
    $region58: #{tpu_custom_call.1} parent=1 // pred_check
      _
    $region59: #{tpu_custom_call.1} parent=1 // pred_check_branch
      %123 = sbr.rel (0) target = $region61
    $region60: #{tpu_custom_call.1} parent=1 // pred_region
      %124 = dma.done [#allocation12], 4096
    $region61: #{tpu_custom_call.1} parent=1 // pred_fallthru
      _
    // Predicated region
    $region62: #{tpu_custom_call.1} parent=1 // pred_check
      _
    $region63: #{tpu_custom_call.1} parent=1 // pred_check_branch
      %126 = sbr.rel (0) target = $region65
    $region64: #{tpu_custom_call.1} parent=1 // pred_region
      %127 = dma.done [#allocation12], 2048
    $region65: #{tpu_custom_call.1} parent=1 // pred_fallthru
      _
    %v129 = vld [vmem:[#allocation2] sm:$0xff]
    %v130 = vld [vmem:[#allocation2 + $0x8] sm:$0xff]
    %v131 = vld [vmem:[#allocation2 + $0x10] sm:$0xff]
    %v132 = vld [vmem:[#allocation2 + $0x18] sm:$0xff]
    %v133 = vld [vmem:[#allocation2 + $0x20] sm:$0xff]
    %v134 = vld [vmem:[#allocation2 + $0x28] sm:$0xff]
    %v135 = vld [vmem:[#allocation2 + $0x30] sm:$0xff]
    %v136 = vld [vmem:[#allocation2 + $0x38] sm:$0xff]
    %v137 = vld [vmem:[#allocation2 + $0x40] sm:$0xff]
    %v138 = vld [vmem:[#allocation2 + $0x48] sm:$0xff]
    %v139 = vld [vmem:[#allocation2 + $0x50] sm:$0xff]
    %v140 = vld [vmem:[#allocation2 + $0x58] sm:$0xff]
    %v141 = vld [vmem:[#allocation2 + $0x60] sm:$0xff]
    %v142 = vld [vmem:[#allocation2 + $0x68] sm:$0xff]
    %v143 = vld [vmem:[#allocation2 + $0x70] sm:$0xff]
    %v144 = vld [vmem:[#allocation2 + $0x78] sm:$0xff]
    %v145 = vld [vmem:[#allocation2 + $0x80] sm:$0xff]
    %v146 = vld [vmem:[#allocation2 + $0x88] sm:$0xff]
    %v147 = vld [vmem:[#allocation2 + $0x90] sm:$0xff]
    %v148 = vld [vmem:[#allocation2 + $0x98] sm:$0xff]
    %v149 = vld [vmem:[#allocation2 + $0xa0] sm:$0xff]
    %v150 = vld [vmem:[#allocation2 + $0xa8] sm:$0xff]
    %v151 = vld [vmem:[#allocation2 + $0xb0] sm:$0xff]
    %v152 = vld [vmem:[#allocation2 + $0xb8] sm:$0xff]
    %v153 = vld [vmem:[#allocation2 + $0xc0] sm:$0xff]
    %v154 = vld [vmem:[#allocation2 + $0xc8] sm:$0xff]
    %v155 = vld [vmem:[#allocation2 + $0xd0] sm:$0xff]
    %v156 = vld [vmem:[#allocation2 + $0xd8] sm:$0xff]
    %v157 = vld [vmem:[#allocation2 + $0xe0] sm:$0xff]
    %v158 = vld [vmem:[#allocation2 + $0xe8] sm:$0xff]
    %v159 = vld [vmem:[#allocation2 + $0xf0] sm:$0xff]
    %v160 = vld [vmem:[#allocation2 + $0xf8] sm:$0xff]
    %v161 = vmul.f32 %v129, %v129
    %v162 = vmul.f32 %v130, %v130
    %v163 = vmul.f32 %v131, %v131
    %v164 = vmul.f32 %v132, %v132
    %v165 = vmul.f32 %v133, %v133
    %v166 = vmul.f32 %v134, %v134
    %v167 = vmul.f32 %v135, %v135
    %v168 = vmul.f32 %v136, %v136
    %v169 = vmul.f32 %v137, %v137
    %v170 = vmul.f32 %v138, %v138
    %v171 = vmul.f32 %v139, %v139
    %v172 = vmul.f32 %v140, %v140
    %v173 = vmul.f32 %v141, %v141
    %v174 = vmul.f32 %v142, %v142
    %v175 = vmul.f32 %v143, %v143
    %v176 = vmul.f32 %v144, %v144
    %v177 = vmul.f32 %v145, %v145
    %v178 = vmul.f32 %v146, %v146
    %v179 = vmul.f32 %v147, %v147
    %v180 = vmul.f32 %v148, %v148
    %v181 = vmul.f32 %v149, %v149
    %v182 = vmul.f32 %v150, %v150
    %v183 = vmul.f32 %v151, %v151
    %v184 = vmul.f32 %v152, %v152
    %v185 = vmul.f32 %v153, %v153
    %v186 = vmul.f32 %v154, %v154
    %v187 = vmul.f32 %v155, %v155
    %v188 = vmul.f32 %v156, %v156
    %v189 = vmul.f32 %v157, %v157
    %v190 = vmul.f32 %v158, %v158
    %v191 = vmul.f32 %v159, %v159
    %v192 = vmul.f32 %v160, %v160
    %v193 = vadd.f32 %v161, %v162
    %194 = vadd.xlane.f32.xlu0 %v193
    %v195 = vpop.xlane.xlu0 %194
    %v196 = vadd.f32 %v163, %v164
    %197 = vadd.xlane.f32.xlu0 %v196
    %v198 = vpop.xlane.xlu0 %197
    %v199 = vadd.f32 %v165, %v166
    %200 = vadd.xlane.f32.xlu0 %v199
    %v201 = vpop.xlane.xlu0 %200
    %v202 = vadd.f32 %v167, %v168
    %203 = vadd.xlane.f32.xlu0 %v202
    %v204 = vpop.xlane.xlu0 %203
    %v205 = vadd.f32 %v169, %v170
    %206 = vadd.xlane.f32.xlu0 %v205
    %v207 = vpop.xlane.xlu0 %206
    %v208 = vadd.f32 %v171, %v172
    %209 = vadd.xlane.f32.xlu0 %v208
    %v210 = vpop.xlane.xlu0 %209
    %v211 = vadd.f32 %v173, %v174
    %212 = vadd.xlane.f32.xlu0 %v211
    %v213 = vpop.xlane.xlu0 %212
    %v214 = vadd.f32 %v175, %v176
    %215 = vadd.xlane.f32.xlu0 %v214
    %v216 = vpop.xlane.xlu0 %215
    %v217 = vadd.f32 %v177, %v178
    %218 = vadd.xlane.f32.xlu0 %v217
    %v219 = vpop.xlane.xlu0 %218
    %v220 = vadd.f32 %v179, %v180
    %221 = vadd.xlane.f32.xlu0 %v220
    %v222 = vpop.xlane.xlu0 %221
    %v223 = vadd.f32 %v181, %v182
    %224 = vadd.xlane.f32.xlu0 %v223
    %v225 = vpop.xlane.xlu0 %224
    %v226 = vadd.f32 %v183, %v184
    %227 = vadd.xlane.f32.xlu0 %v226
    %v228 = vpop.xlane.xlu0 %227
    %v229 = vadd.f32 %v185, %v186
    %230 = vadd.xlane.f32.xlu0 %v229
    %v231 = vpop.xlane.xlu0 %230
    %v232 = vadd.f32 %v187, %v188
    %233 = vadd.xlane.f32.xlu0 %v232
    %v234 = vpop.xlane.xlu0 %233
    %v235 = vadd.f32 %v189, %v190
    %236 = vadd.xlane.f32.xlu0 %v235
    %v237 = vpop.xlane.xlu0 %236
    %v238 = vadd.f32 %v191, %v192
    %239 = vadd.xlane.f32.xlu0 %v238
    %v240 = vpop.xlane.xlu0 %239
    %v241 = vmax.f32 %v195, 1e-24
    %v242 = vmax.f32 %v198, 1e-24
    %v243 = vmax.f32 %v201, 1e-24
    %v244 = vmax.f32 %v204, 1e-24
    %v245 = vmax.f32 %v207, 1e-24
    %v246 = vmax.f32 %v210, 1e-24
    %v247 = vmax.f32 %v213, 1e-24
    %v248 = vmax.f32 %v216, 1e-24
    %v249 = vmax.f32 %v219, 1e-24
    %v250 = vmax.f32 %v222, 1e-24
    %v251 = vmax.f32 %v225, 1e-24
    %v252 = vmax.f32 %v228, 1e-24
    %v253 = vmax.f32 %v231, 1e-24
    %v254 = vmax.f32 %v234, 1e-24
    %v255 = vmax.f32 %v237, 1e-24
    %v256 = vmax.f32 %v240, 1e-24
    %v257 = vrsqrt.pop %v241
    %v258 = vrsqrt.pop %v242
    %v259 = vrsqrt.pop %v243
    %v260 = vrsqrt.pop %v244
    %v261 = vrsqrt.pop %v245
    %v262 = vrsqrt.pop %v246
    %v263 = vrsqrt.pop %v247
    %v264 = vrsqrt.pop %v248
    %v265 = vrsqrt.pop %v249
    %v266 = vrsqrt.pop %v250
    %v267 = vrsqrt.pop %v251
    %v268 = vrsqrt.pop %v252
    %v269 = vrsqrt.pop %v253
    %v270 = vrsqrt.pop %v254
    %v271 = vrsqrt.pop %v255
    %v272 = vrsqrt.pop %v256
    %v273 = vmul.f32 %v129, %v257
    %v274 = vmul.f32 %v130, %v257
    %v275 = vmul.f32 %v131, %v258
    %v276 = vmul.f32 %v132, %v258
    %v277 = vmul.f32 %v133, %v259
    %v278 = vmul.f32 %v134, %v259
    %v279 = vmul.f32 %v135, %v260
    %v280 = vmul.f32 %v136, %v260
    %v281 = vmul.f32 %v137, %v261
    %v282 = vmul.f32 %v138, %v261
    %v283 = vmul.f32 %v139, %v262
    %v284 = vmul.f32 %v140, %v262
    %v285 = vmul.f32 %v141, %v263
    %v286 = vmul.f32 %v142, %v263
    %v287 = vmul.f32 %v143, %v264
    %v288 = vmul.f32 %v144, %v264
    %v289 = vmul.f32 %v145, %v265
    %v290 = vmul.f32 %v146, %v265
    %v291 = vmul.f32 %v147, %v266
    %v292 = vmul.f32 %v148, %v266
    %v293 = vmul.f32 %v149, %v267
    %v294 = vmul.f32 %v150, %v267
    %v295 = vmul.f32 %v151, %v268
    %v296 = vmul.f32 %v152, %v268
    %v297 = vmul.f32 %v153, %v269
    %v298 = vmul.f32 %v154, %v269
    %v299 = vmul.f32 %v155, %v270
    %v300 = vmul.f32 %v156, %v270
    %v301 = vmul.f32 %v157, %v271
    %v302 = vmul.f32 %v158, %v271
    %v303 = vmul.f32 %v159, %v272
    %v304 = vmul.f32 %v160, %v272
    %v305 = vld [vmem:[#allocation5] sm:$0xff]
    %v306 = vld [vmem:[#allocation5 + $0x8] sm:$0xff]
    %v307 = vld [vmem:[#allocation5 + $0x10] sm:$0xff]
    %v308 = vld [vmem:[#allocation5 + $0x18] sm:$0xff]
    %v309 = vld [vmem:[#allocation5 + $0x20] sm:$0xff]
    %v310 = vld [vmem:[#allocation5 + $0x28] sm:$0xff]
    %v311 = vld [vmem:[#allocation5 + $0x30] sm:$0xff]
    %v312 = vld [vmem:[#allocation5 + $0x38] sm:$0xff]
    %v313 = vld [vmem:[#allocation5 + $0x40] sm:$0xff]
    %v314 = vld [vmem:[#allocation5 + $0x48] sm:$0xff]
    %v315 = vld [vmem:[#allocation5 + $0x50] sm:$0xff]
    %v316 = vld [vmem:[#allocation5 + $0x58] sm:$0xff]
    %v317 = vld [vmem:[#allocation5 + $0x60] sm:$0xff]
    %v318 = vld [vmem:[#allocation5 + $0x68] sm:$0xff]
    %v319 = vld [vmem:[#allocation5 + $0x70] sm:$0xff]
    %v320 = vld [vmem:[#allocation5 + $0x78] sm:$0xff]
    %v321 = vld [vmem:[#allocation5 + $0x80] sm:$0xff]
    %v322 = vld [vmem:[#allocation5 + $0x88] sm:$0xff]
    %v323 = vld [vmem:[#allocation5 + $0x90] sm:$0xff]
    %v324 = vld [vmem:[#allocation5 + $0x98] sm:$0xff]
    %v325 = vld [vmem:[#allocation5 + $0xa0] sm:$0xff]
    %v326 = vld [vmem:[#allocation5 + $0xa8] sm:$0xff]
    %v327 = vld [vmem:[#allocation5 + $0xb0] sm:$0xff]
    %v328 = vld [vmem:[#allocation5 + $0xb8] sm:$0xff]
    %v329 = vld [vmem:[#allocation5 + $0xc0] sm:$0xff]
    %v330 = vld [vmem:[#allocation5 + $0xc8] sm:$0xff]
    %v331 = vld [vmem:[#allocation5 + $0xd0] sm:$0xff]
    %v332 = vld [vmem:[#allocation5 + $0xd8] sm:$0xff]
    %v333 = vld [vmem:[#allocation5 + $0xe0] sm:$0xff]
    %v334 = vld [vmem:[#allocation5 + $0xe8] sm:$0xff]
    %v335 = vld [vmem:[#allocation5 + $0xf0] sm:$0xff]
    %v336 = vld [vmem:[#allocation5 + $0xf8] sm:$0xff]
    %v337 = vmul.f32 %v305, %v305
    %v338 = vmul.f32 %v306, %v306
    %v339 = vmul.f32 %v307, %v307
    %v340 = vmul.f32 %v308, %v308
    %v341 = vmul.f32 %v309, %v309
    %v342 = vmul.f32 %v310, %v310
    %v343 = vmul.f32 %v311, %v311
    %v344 = vmul.f32 %v312, %v312
    %v345 = vmul.f32 %v313, %v313
    %v346 = vmul.f32 %v314, %v314
    %v347 = vmul.f32 %v315, %v315
    %v348 = vmul.f32 %v316, %v316
    %v349 = vmul.f32 %v317, %v317
    %v350 = vmul.f32 %v318, %v318
    %v351 = vmul.f32 %v319, %v319
    %v352 = vmul.f32 %v320, %v320
    %v353 = vmul.f32 %v321, %v321
    %v354 = vmul.f32 %v322, %v322
    %v355 = vmul.f32 %v323, %v323
    %v356 = vmul.f32 %v324, %v324
    %v357 = vmul.f32 %v325, %v325
    %v358 = vmul.f32 %v326, %v326
    %v359 = vmul.f32 %v327, %v327
    %v360 = vmul.f32 %v328, %v328
    %v361 = vmul.f32 %v329, %v329
    %v362 = vmul.f32 %v330, %v330
    %v363 = vmul.f32 %v331, %v331
    %v364 = vmul.f32 %v332, %v332
    %v365 = vmul.f32 %v333, %v333
    %v366 = vmul.f32 %v334, %v334
    %v367 = vmul.f32 %v335, %v335
    %v368 = vmul.f32 %v336, %v336
    %v369 = vadd.f32 %v337, %v338
    %370 = vadd.xlane.f32.xlu0 %v369
    %v371 = vpop.xlane.xlu0 %370
    %v372 = vadd.f32 %v339, %v340
    %373 = vadd.xlane.f32.xlu0 %v372
    %v374 = vpop.xlane.xlu0 %373
    %v375 = vadd.f32 %v341, %v342
    %376 = vadd.xlane.f32.xlu0 %v375
    %v377 = vpop.xlane.xlu0 %376
    %v378 = vadd.f32 %v343, %v344
    %379 = vadd.xlane.f32.xlu0 %v378
    %v380 = vpop.xlane.xlu0 %379
    %v381 = vadd.f32 %v345, %v346
    %382 = vadd.xlane.f32.xlu0 %v381
    %v383 = vpop.xlane.xlu0 %382
    %v384 = vadd.f32 %v347, %v348
    %385 = vadd.xlane.f32.xlu0 %v384
    %v386 = vpop.xlane.xlu0 %385
    %v387 = vadd.f32 %v349, %v350
    %388 = vadd.xlane.f32.xlu0 %v387
    %v389 = vpop.xlane.xlu0 %388
    %v390 = vadd.f32 %v351, %v352
    %391 = vadd.xlane.f32.xlu0 %v390
    %v392 = vpop.xlane.xlu0 %391
    %v393 = vadd.f32 %v353, %v354
    %394 = vadd.xlane.f32.xlu0 %v393
    %v395 = vpop.xlane.xlu0 %394
    %v396 = vadd.f32 %v355, %v356
    %397 = vadd.xlane.f32.xlu0 %v396
    %v398 = vpop.xlane.xlu0 %397
    %v399 = vadd.f32 %v357, %v358
    %400 = vadd.xlane.f32.xlu0 %v399
    %v401 = vpop.xlane.xlu0 %400
    %v402 = vadd.f32 %v359, %v360
    %403 = vadd.xlane.f32.xlu0 %v402
    %v404 = vpop.xlane.xlu0 %403
    %v405 = vadd.f32 %v361, %v362
    %406 = vadd.xlane.f32.xlu0 %v405
    %v407 = vpop.xlane.xlu0 %406
    %v408 = vadd.f32 %v363, %v364
    %409 = vadd.xlane.f32.xlu0 %v408
    %v410 = vpop.xlane.xlu0 %409
    %v411 = vadd.f32 %v365, %v366
    %412 = vadd.xlane.f32.xlu0 %v411
    %v413 = vpop.xlane.xlu0 %412
    %v414 = vadd.f32 %v367, %v368
    %415 = vadd.xlane.f32.xlu0 %v414
    %v416 = vpop.xlane.xlu0 %415
    %v417 = vmax.f32 %v371, 1e-24
    %v418 = vmax.f32 %v374, 1e-24
    %v419 = vmax.f32 %v377, 1e-24
    %v420 = vmax.f32 %v380, 1e-24
    %v421 = vmax.f32 %v383, 1e-24
    %v422 = vmax.f32 %v386, 1e-24
    %v423 = vmax.f32 %v389, 1e-24
    %v424 = vmax.f32 %v392, 1e-24
    %v425 = vmax.f32 %v395, 1e-24
    %v426 = vmax.f32 %v398, 1e-24
    %v427 = vmax.f32 %v401, 1e-24
    %v428 = vmax.f32 %v404, 1e-24
    %v429 = vmax.f32 %v407, 1e-24
    %v430 = vmax.f32 %v410, 1e-24
    %v431 = vmax.f32 %v413, 1e-24
    %v432 = vmax.f32 %v416, 1e-24
    %v433 = vrsqrt.pop %v417
    %v434 = vrsqrt.pop %v418
    %v435 = vrsqrt.pop %v419
    %v436 = vrsqrt.pop %v420
    %v437 = vrsqrt.pop %v421
    %v438 = vrsqrt.pop %v422
    %v439 = vrsqrt.pop %v423
    %v440 = vrsqrt.pop %v424
    %v441 = vrsqrt.pop %v425
    %v442 = vrsqrt.pop %v426
    %v443 = vrsqrt.pop %v427
    %v444 = vrsqrt.pop %v428
    %v445 = vrsqrt.pop %v429
    %v446 = vrsqrt.pop %v430
    %v447 = vrsqrt.pop %v431
    %v448 = vrsqrt.pop %v432
    %v449 = vmul.f32 %v305, %v433
    %v450 = vmul.f32 %v306, %v433
    %v451 = vmul.f32 %v307, %v434
    %v452 = vmul.f32 %v308, %v434
    %v453 = vmul.f32 %v309, %v435
    %v454 = vmul.f32 %v310, %v435
    %v455 = vmul.f32 %v311, %v436
    %v456 = vmul.f32 %v312, %v436
    %v457 = vmul.f32 %v313, %v437
    %v458 = vmul.f32 %v314, %v437
    %v459 = vmul.f32 %v315, %v438
    %v460 = vmul.f32 %v316, %v438
    %v461 = vmul.f32 %v317, %v439
    %v462 = vmul.f32 %v318, %v439
    %v463 = vmul.f32 %v319, %v440
    %v464 = vmul.f32 %v320, %v440
    %v465 = vmul.f32 %v321, %v441
    %v466 = vmul.f32 %v322, %v441
    %v467 = vmul.f32 %v323, %v442
    %v468 = vmul.f32 %v324, %v442
    %v469 = vmul.f32 %v325, %v443
    %v470 = vmul.f32 %v326, %v443
    %v471 = vmul.f32 %v327, %v444
    %v472 = vmul.f32 %v328, %v444
    %v473 = vmul.f32 %v329, %v445
    %v474 = vmul.f32 %v330, %v445
    %v475 = vmul.f32 %v331, %v446
    %v476 = vmul.f32 %v332, %v446
    %v477 = vmul.f32 %v333, %v447
    %v478 = vmul.f32 %v334, %v447
    %v479 = vmul.f32 %v335, %v448
    %v480 = vmul.f32 %v336, %v448
    %v481 = vld [vmem:[#allocation7] sm:$0xff]
    %v482 = vld [vmem:[#allocation7 + $0x8] sm:$0xff]
    %v483 = vld [vmem:[#allocation7 + $0x10] sm:$0xff]
    %v484 = vld [vmem:[#allocation7 + $0x18] sm:$0xff]
    %v485 = vld [vmem:[#allocation7 + $0x20] sm:$0xff]
    %v486 = vld [vmem:[#allocation7 + $0x28] sm:$0xff]
    %v487 = vld [vmem:[#allocation7 + $0x30] sm:$0xff]
    %v488 = vld [vmem:[#allocation7 + $0x38] sm:$0xff]
    %v489 = vld [vmem:[#allocation7 + $0x40] sm:$0xff]
    %v490 = vld [vmem:[#allocation7 + $0x48] sm:$0xff]
    %v491 = vld [vmem:[#allocation7 + $0x50] sm:$0xff]
    %v492 = vld [vmem:[#allocation7 + $0x58] sm:$0xff]
    %v493 = vld [vmem:[#allocation7 + $0x60] sm:$0xff]
    %v494 = vld [vmem:[#allocation7 + $0x68] sm:$0xff]
    %v495 = vld [vmem:[#allocation7 + $0x70] sm:$0xff]
    %v496 = vld [vmem:[#allocation7 + $0x78] sm:$0xff]
    %v497 = vld [vmem:[#allocation7 + $0x80] sm:$0xff]
    %v498 = vld [vmem:[#allocation7 + $0x88] sm:$0xff]
    %v499 = vld [vmem:[#allocation7 + $0x90] sm:$0xff]
    %v500 = vld [vmem:[#allocation7 + $0x98] sm:$0xff]
    %v501 = vld [vmem:[#allocation7 + $0xa0] sm:$0xff]
    %v502 = vld [vmem:[#allocation7 + $0xa8] sm:$0xff]
    %v503 = vld [vmem:[#allocation7 + $0xb0] sm:$0xff]
    %v504 = vld [vmem:[#allocation7 + $0xb8] sm:$0xff]
    %v505 = vld [vmem:[#allocation7 + $0xc0] sm:$0xff]
    %v506 = vld [vmem:[#allocation7 + $0xc8] sm:$0xff]
    %v507 = vld [vmem:[#allocation7 + $0xd0] sm:$0xff]
    %v508 = vld [vmem:[#allocation7 + $0xd8] sm:$0xff]
    %v509 = vld [vmem:[#allocation7 + $0xe0] sm:$0xff]
    %v510 = vld [vmem:[#allocation7 + $0xe8] sm:$0xff]
    %v511 = vld [vmem:[#allocation7 + $0xf0] sm:$0xff]
    %v512 = vld [vmem:[#allocation7 + $0xf8] sm:$0xff]
    %v513 = vmul.f32 %v481, %v481
    %v514 = vmul.f32 %v482, %v482
    %v515 = vmul.f32 %v483, %v483
    %v516 = vmul.f32 %v484, %v484
    %v517 = vmul.f32 %v485, %v485
    %v518 = vmul.f32 %v486, %v486
    %v519 = vmul.f32 %v487, %v487
    %v520 = vmul.f32 %v488, %v488
    %v521 = vmul.f32 %v489, %v489
    %v522 = vmul.f32 %v490, %v490
    %v523 = vmul.f32 %v491, %v491
    %v524 = vmul.f32 %v492, %v492
    %v525 = vmul.f32 %v493, %v493
    %v526 = vmul.f32 %v494, %v494
    %v527 = vmul.f32 %v495, %v495
    %v528 = vmul.f32 %v496, %v496
    %v529 = vmul.f32 %v497, %v497
    %v530 = vmul.f32 %v498, %v498
    %v531 = vmul.f32 %v499, %v499
    %v532 = vmul.f32 %v500, %v500
    %v533 = vmul.f32 %v501, %v501
    %v534 = vmul.f32 %v502, %v502
    %v535 = vmul.f32 %v503, %v503
    %v536 = vmul.f32 %v504, %v504
    %v537 = vmul.f32 %v505, %v505
    %v538 = vmul.f32 %v506, %v506
    %v539 = vmul.f32 %v507, %v507
    %v540 = vmul.f32 %v508, %v508
    %v541 = vmul.f32 %v509, %v509
    %v542 = vmul.f32 %v510, %v510
    %v543 = vmul.f32 %v511, %v511
    %v544 = vmul.f32 %v512, %v512
    %v545 = vadd.f32 %v513, %v514
    %546 = vadd.xlane.f32.xlu0 %v545
    %v547 = vpop.xlane.xlu0 %546
    %v548 = vadd.f32 %v515, %v516
    %549 = vadd.xlane.f32.xlu0 %v548
    %v550 = vpop.xlane.xlu0 %549
    %v551 = vadd.f32 %v517, %v518
    %552 = vadd.xlane.f32.xlu0 %v551
    %v553 = vpop.xlane.xlu0 %552
    %v554 = vadd.f32 %v519, %v520
    %555 = vadd.xlane.f32.xlu0 %v554
    %v556 = vpop.xlane.xlu0 %555
    %v557 = vadd.f32 %v521, %v522
    %558 = vadd.xlane.f32.xlu0 %v557
    %v559 = vpop.xlane.xlu0 %558
    %v560 = vadd.f32 %v523, %v524
    %561 = vadd.xlane.f32.xlu0 %v560
    %v562 = vpop.xlane.xlu0 %561
    %v563 = vadd.f32 %v525, %v526
    %564 = vadd.xlane.f32.xlu0 %v563
    %v565 = vpop.xlane.xlu0 %564
    %v566 = vadd.f32 %v527, %v528
    %567 = vadd.xlane.f32.xlu0 %v566
    %v568 = vpop.xlane.xlu0 %567
    %v569 = vadd.f32 %v529, %v530
    %570 = vadd.xlane.f32.xlu0 %v569
    %v571 = vpop.xlane.xlu0 %570
    %v572 = vadd.f32 %v531, %v532
    %573 = vadd.xlane.f32.xlu0 %v572
    %v574 = vpop.xlane.xlu0 %573
    %v575 = vadd.f32 %v533, %v534
    %576 = vadd.xlane.f32.xlu0 %v575
    %v577 = vpop.xlane.xlu0 %576
    %v578 = vadd.f32 %v535, %v536
    %579 = vadd.xlane.f32.xlu0 %v578
    %v580 = vpop.xlane.xlu0 %579
    %v581 = vadd.f32 %v537, %v538
    %582 = vadd.xlane.f32.xlu0 %v581
    %v583 = vpop.xlane.xlu0 %582
    %v584 = vadd.f32 %v539, %v540
    %585 = vadd.xlane.f32.xlu0 %v584
    %v586 = vpop.xlane.xlu0 %585
    %v587 = vadd.f32 %v541, %v542
    %588 = vadd.xlane.f32.xlu0 %v587
    %v589 = vpop.xlane.xlu0 %588
    %v590 = vadd.f32 %v543, %v544
    %591 = vadd.xlane.f32.xlu0 %v590
    %v592 = vpop.xlane.xlu0 %591
    %v593 = vmax.f32 %v547, 1e-24
    %v594 = vmax.f32 %v550, 1e-24
    %v595 = vmax.f32 %v553, 1e-24
    %v596 = vmax.f32 %v556, 1e-24
    %v597 = vmax.f32 %v559, 1e-24
    %v598 = vmax.f32 %v562, 1e-24
    %v599 = vmax.f32 %v565, 1e-24
    %v600 = vmax.f32 %v568, 1e-24
    %v601 = vmax.f32 %v571, 1e-24
    %v602 = vmax.f32 %v574, 1e-24
    %v603 = vmax.f32 %v577, 1e-24
    %v604 = vmax.f32 %v580, 1e-24
    %v605 = vmax.f32 %v583, 1e-24
    %v606 = vmax.f32 %v586, 1e-24
    %v607 = vmax.f32 %v589, 1e-24
    %v608 = vmax.f32 %v592, 1e-24
    %v609 = vrsqrt.pop %v593
    %v610 = vrsqrt.pop %v594
    %v611 = vrsqrt.pop %v595
    %v612 = vrsqrt.pop %v596
    %v613 = vrsqrt.pop %v597
    %v614 = vrsqrt.pop %v598
    %v615 = vrsqrt.pop %v599
    %v616 = vrsqrt.pop %v600
    %v617 = vrsqrt.pop %v601
    %v618 = vrsqrt.pop %v602
    %v619 = vrsqrt.pop %v603
    %v620 = vrsqrt.pop %v604
    %v621 = vrsqrt.pop %v605
    %v622 = vrsqrt.pop %v606
    %v623 = vrsqrt.pop %v607
    %v624 = vrsqrt.pop %v608
    %v625 = vmul.f32 %v481, %v609
    %v626 = vmul.f32 %v482, %v609
    %v627 = vmul.f32 %v483, %v610
    %v628 = vmul.f32 %v484, %v610
    %v629 = vmul.f32 %v485, %v611
    %v630 = vmul.f32 %v486, %v611
    %v631 = vmul.f32 %v487, %v612
    %v632 = vmul.f32 %v488, %v612
    %v633 = vmul.f32 %v489, %v613
    %v634 = vmul.f32 %v490, %v613
    %v635 = vmul.f32 %v491, %v614
    %v636 = vmul.f32 %v492, %v614
    %v637 = vmul.f32 %v493, %v615
    %v638 = vmul.f32 %v494, %v615
    %v639 = vmul.f32 %v495, %v616
    %v640 = vmul.f32 %v496, %v616
    %v641 = vmul.f32 %v497, %v617
    %v642 = vmul.f32 %v498, %v617
    %v643 = vmul.f32 %v499, %v618
    %v644 = vmul.f32 %v500, %v618
    %v645 = vmul.f32 %v501, %v619
    %v646 = vmul.f32 %v502, %v619
    %v647 = vmul.f32 %v503, %v620
    %v648 = vmul.f32 %v504, %v620
    %v649 = vmul.f32 %v505, %v621
    %v650 = vmul.f32 %v506, %v621
    %v651 = vmul.f32 %v507, %v622
    %v652 = vmul.f32 %v508, %v622
    %v653 = vmul.f32 %v509, %v623
    %v654 = vmul.f32 %v510, %v623
    %v655 = vmul.f32 %v511, %v624
    %v656 = vmul.f32 %v512, %v624
    %v657 = vld [vmem:[#allocation8] sm:$0xff]
    %v658 = vld [vmem:[#allocation8 + $0x8] sm:$0xff]
    %v659 = vld [vmem:[#allocation8 + $0x10] sm:$0xff]
    %v660 = vld [vmem:[#allocation8 + $0x18] sm:$0xff]
    %v661 = vld [vmem:[#allocation8 + $0x20] sm:$0xff]
    %v662 = vld [vmem:[#allocation8 + $0x28] sm:$0xff]
    %v663 = vld [vmem:[#allocation8 + $0x30] sm:$0xff]
    %v664 = vld [vmem:[#allocation8 + $0x38] sm:$0xff]
    %v665 = vld [vmem:[#allocation8 + $0x40] sm:$0xff]
    %v666 = vld [vmem:[#allocation8 + $0x48] sm:$0xff]
    %v667 = vld [vmem:[#allocation8 + $0x50] sm:$0xff]
    %v668 = vld [vmem:[#allocation8 + $0x58] sm:$0xff]
    %v669 = vld [vmem:[#allocation8 + $0x60] sm:$0xff]
    %v670 = vld [vmem:[#allocation8 + $0x68] sm:$0xff]
    %v671 = vld [vmem:[#allocation8 + $0x70] sm:$0xff]
    %v672 = vld [vmem:[#allocation8 + $0x78] sm:$0xff]
    %v673 = vld [vmem:[#allocation8 + $0x80] sm:$0xff]
    %v674 = vld [vmem:[#allocation8 + $0x88] sm:$0xff]
    %v675 = vld [vmem:[#allocation8 + $0x90] sm:$0xff]
    %v676 = vld [vmem:[#allocation8 + $0x98] sm:$0xff]
    %v677 = vld [vmem:[#allocation8 + $0xa0] sm:$0xff]
    %v678 = vld [vmem:[#allocation8 + $0xa8] sm:$0xff]
    %v679 = vld [vmem:[#allocation8 + $0xb0] sm:$0xff]
    %v680 = vld [vmem:[#allocation8 + $0xb8] sm:$0xff]
    %v681 = vld [vmem:[#allocation8 + $0xc0] sm:$0xff]
    %v682 = vld [vmem:[#allocation8 + $0xc8] sm:$0xff]
    %v683 = vld [vmem:[#allocation8 + $0xd0] sm:$0xff]
    %v684 = vld [vmem:[#allocation8 + $0xd8] sm:$0xff]
    %v685 = vld [vmem:[#allocation8 + $0xe0] sm:$0xff]
    %v686 = vld [vmem:[#allocation8 + $0xe8] sm:$0xff]
    %v687 = vld [vmem:[#allocation8 + $0xf0] sm:$0xff]
    %v688 = vld [vmem:[#allocation8 + $0xf8] sm:$0xff]
    %v689 = vpack.c.bf16 %v275, %v273
    %v690 = vpack.c.bf16 %v276, %v274
    %v691 = vpack.c.bf16 %v279, %v277
    %v692 = vpack.c.bf16 %v280, %v278
    %v693 = vpack.c.bf16 %v283, %v281
    %v694 = vpack.c.bf16 %v284, %v282
    %v695 = vpack.c.bf16 %v287, %v285
    %v696 = vpack.c.bf16 %v288, %v286
    %v697 = vpack.c.bf16 %v291, %v289
    %v698 = vpack.c.bf16 %v292, %v290
    %v699 = vpack.c.bf16 %v295, %v293
    %v700 = vpack.c.bf16 %v296, %v294
    %v701 = vpack.c.bf16 %v299, %v297
    %v702 = vpack.c.bf16 %v300, %v298
    %v703 = vpack.c.bf16 %v303, %v301
    %v704 = vpack.c.bf16 %v304, %v302
    %v737 = vunpack.c.l.b16 %v657
    %v738 = vunpack.c.h.b16 %v657
    %v739 = vunpack.c.l.b16 %v658
    %v740 = vunpack.c.h.b16 %v658
    %v741 = vunpack.c.l.b16 %v659
    %v742 = vunpack.c.h.b16 %v659
    %v743 = vunpack.c.l.b16 %v660
    %v744 = vunpack.c.h.b16 %v660
    %v745 = vunpack.c.l.b16 %v661
    %v746 = vunpack.c.h.b16 %v661
    %v747 = vunpack.c.l.b16 %v662
    %v748 = vunpack.c.h.b16 %v662
    %v749 = vunpack.c.l.b16 %v663
    %v750 = vunpack.c.h.b16 %v663
    %v751 = vunpack.c.l.b16 %v664
    %v752 = vunpack.c.h.b16 %v664
    %v753 = vunpack.c.l.b16 %v665
    %v754 = vunpack.c.h.b16 %v665
    %v755 = vunpack.c.l.b16 %v666
    %v756 = vunpack.c.h.b16 %v666
    %v757 = vunpack.c.l.b16 %v667
    %v758 = vunpack.c.h.b16 %v667
    %v759 = vunpack.c.l.b16 %v668
    %v760 = vunpack.c.h.b16 %v668
    %v761 = vunpack.c.l.b16 %v669
    %v762 = vunpack.c.h.b16 %v669
    %v763 = vunpack.c.l.b16 %v670
    %v764 = vunpack.c.h.b16 %v670
    %v765 = vunpack.c.l.b16 %v671
    %v766 = vunpack.c.h.b16 %v671
    %v767 = vunpack.c.l.b16 %v672
    %v768 = vunpack.c.h.b16 %v672
    %v769 = vunpack.c.l.b16 %v673
    %v770 = vunpack.c.h.b16 %v673
    %v771 = vunpack.c.l.b16 %v674
    %v772 = vunpack.c.h.b16 %v674
    %v773 = vunpack.c.l.b16 %v675
    %v774 = vunpack.c.h.b16 %v675
    %v775 = vunpack.c.l.b16 %v676
    %v776 = vunpack.c.h.b16 %v676
    %v777 = vunpack.c.l.b16 %v677
    %v778 = vunpack.c.h.b16 %v677
    %v779 = vunpack.c.l.b16 %v678
    %v780 = vunpack.c.h.b16 %v678
    %v781 = vunpack.c.l.b16 %v679
    %v782 = vunpack.c.h.b16 %v679
    %v783 = vunpack.c.l.b16 %v680
    %v784 = vunpack.c.h.b16 %v680
    %v785 = vunpack.c.l.b16 %v681
    %v786 = vunpack.c.h.b16 %v681
    %v787 = vunpack.c.l.b16 %v682
    %v788 = vunpack.c.h.b16 %v682
    %v789 = vunpack.c.l.b16 %v683
    %v790 = vunpack.c.h.b16 %v683
    %v791 = vunpack.c.l.b16 %v684
    %v792 = vunpack.c.h.b16 %v684
    %v793 = vunpack.c.l.b16 %v685
    %v794 = vunpack.c.h.b16 %v685
    %v795 = vunpack.c.l.b16 %v686
    %v796 = vunpack.c.h.b16 %v686
    %v797 = vunpack.c.l.b16 %v687
    %v798 = vunpack.c.h.b16 %v687
    %v799 = vunpack.c.l.b16 %v688
    %v800 = vunpack.c.h.b16 %v688
    %v801 = vpack.c.b16 %v739, %v737
    %v802 = vpack.c.b16 %v740, %v738
    %v803 = vpack.c.b16 %v743, %v741
    %v804 = vpack.c.b16 %v744, %v742
    %v805 = vpack.c.b16 %v747, %v745
    %v806 = vpack.c.b16 %v748, %v746
    %v807 = vpack.c.b16 %v751, %v749
    %v808 = vpack.c.b16 %v752, %v750
    %v809 = vpack.c.b16 %v755, %v753
    %v810 = vpack.c.b16 %v756, %v754
    %v811 = vpack.c.b16 %v759, %v757
    %v812 = vpack.c.b16 %v760, %v758
    %v813 = vpack.c.b16 %v763, %v761
    %v814 = vpack.c.b16 %v764, %v762
    %v815 = vpack.c.b16 %v767, %v765
    %v816 = vpack.c.b16 %v768, %v766
    %v817 = vpack.c.b16 %v771, %v769
    %v818 = vpack.c.b16 %v772, %v770
    %v819 = vpack.c.b16 %v775, %v773
    %v820 = vpack.c.b16 %v776, %v774
    %v821 = vpack.c.b16 %v779, %v777
    %v822 = vpack.c.b16 %v780, %v778
    %v823 = vpack.c.b16 %v783, %v781
    %v824 = vpack.c.b16 %v784, %v782
    %v825 = vpack.c.b16 %v787, %v785
    %v826 = vpack.c.b16 %v788, %v786
    %v827 = vpack.c.b16 %v791, %v789
    %v828 = vpack.c.b16 %v792, %v790
    %v829 = vpack.c.b16 %v795, %v793
    %v830 = vpack.c.b16 %v796, %v794
    %v831 = vpack.c.b16 %v799, %v797
    %v832 = vpack.c.b16 %v800, %v798
    %865 = vmatprep.subr.bf16.mxu0 %v802
    %866 = vmatpush1.bf16.msra.mxu0 %v801
    %867 = vmatprep.subr.bf16.mxu0 %v804
    %868 = vmatpush1.bf16.msra.mxu0 %v803
    %869 = vmatprep.subr.bf16.mxu0 %v806
    %870 = vmatpush1.bf16.msra.mxu0 %v805
    %871 = vmatprep.subr.bf16.mxu0 %v808
    %872 = vmatpush1.bf16.msra.mxu0 %v807
    %873 = vmatprep.subr.bf16.mxu0 %v810
    %874 = vmatpush1.bf16.msra.mxu0 %v809
    %875 = vmatprep.subr.bf16.mxu0 %v812
    %876 = vmatpush1.bf16.msra.mxu0 %v811
    %877 = vmatprep.subr.bf16.mxu0 %v814
    %878 = vmatpush1.bf16.msra.mxu0 %v813
    %879 = vmatprep.subr.bf16.mxu0 %v816
    %880 = vmatpush1.bf16.msra.mxu0 %v815
    %881 = vmatprep.subr.bf16.mxu0 %v818
    %882 = vmatpush1.bf16.msra.mxu0 %v817
    %883 = vmatprep.subr.bf16.mxu0 %v820
    %884 = vmatpush1.bf16.msra.mxu0 %v819
    %885 = vmatprep.subr.bf16.mxu0 %v822
    %886 = vmatpush1.bf16.msra.mxu0 %v821
    %887 = vmatprep.subr.bf16.mxu0 %v824
    %888 = vmatpush1.bf16.msra.mxu0 %v823
    %889 = vmatprep.subr.bf16.mxu0 %v826
    %890 = vmatpush1.bf16.msra.mxu0 %v825
    %891 = vmatprep.subr.bf16.mxu0 %v828
    %892 = vmatpush1.bf16.msra.mxu0 %v827
    %893 = vmatprep.subr.bf16.mxu0 %v830
    %894 = vmatpush1.bf16.msra.mxu0 %v829
    %895 = vmatprep.subr.bf16.mxu0 %v832
    %896 = vmatpush1.bf16.msra.mxu0 %v831
    %897 = vmatprep.mubr.bf16.mxu0 %v690
    %898 = vmatmul.mubr.bf16.gmra.mrb[0].mxu0 %v689
    %v899 = vpop.f32.mrb[0].mxu0
    %v900 = vadd.f32 0.0, %v899
    %v901 = vpop.f32.mrb[0].mxu0
    %v902 = vadd.f32 0.0, %v901
    %v903 = vpop.f32.mrb[0].mxu0
    %v904 = vadd.f32 0.0, %v903
    %v905 = vpop.f32.mrb[0].mxu0
    %v906 = vadd.f32 0.0, %v905
    %907 = vmatprep.mubr.bf16.mxu0 %v692
    %908 = vmatmul.mubr.bf16.gmra.mrb[0].mxu0 %v691
    %v909 = vpop.f32.mrb[0].mxu0
    %v910 = vadd.f32 0.0, %v909
    %v911 = vpop.f32.mrb[0].mxu0
    %v912 = vadd.f32 0.0, %v911
    %v913 = vpop.f32.mrb[0].mxu0
    %v914 = vadd.f32 0.0, %v913
    %v915 = vpop.f32.mrb[0].mxu0
    %v916 = vadd.f32 0.0, %v915
    %917 = vmatprep.mubr.bf16.mxu0 %v694
    %918 = vmatmul.mubr.bf16.gmra.mrb[0].mxu0 %v693
    %v919 = vpop.f32.mrb[0].mxu0
    %v920 = vadd.f32 0.0, %v919
    %v921 = vpop.f32.mrb[0].mxu0
    %v922 = vadd.f32 0.0, %v921
    %v923 = vpop.f32.mrb[0].mxu0
    %v924 = vadd.f32 0.0, %v923
    %v925 = vpop.f32.mrb[0].mxu0
    %v926 = vadd.f32 0.0, %v925
    %927 = vmatprep.mubr.bf16.mxu0 %v696
    %928 = vmatmul.mubr.bf16.gmra.mrb[0].mxu0 %v695
    %v929 = vpop.f32.mrb[0].mxu0
    %v930 = vadd.f32 0.0, %v929
    %v931 = vpop.f32.mrb[0].mxu0
    %v932 = vadd.f32 0.0, %v931
    %v933 = vpop.f32.mrb[0].mxu0
    %v934 = vadd.f32 0.0, %v933
    %v935 = vpop.f32.mrb[0].mxu0
    %v936 = vadd.f32 0.0, %v935
    %937 = vmatprep.mubr.bf16.mxu0 %v698
    %938 = vmatmul.mubr.bf16.gmra.mrb[0].mxu0 %v697
    %v939 = vpop.f32.mrb[0].mxu0
    %v940 = vadd.f32 0.0, %v939
    %v941 = vpop.f32.mrb[0].mxu0
    %v942 = vadd.f32 0.0, %v941
    %v943 = vpop.f32.mrb[0].mxu0
    %v944 = vadd.f32 0.0, %v943
    %v945 = vpop.f32.mrb[0].mxu0
    %v946 = vadd.f32 0.0, %v945
    %947 = vmatprep.mubr.bf16.mxu0 %v700
    %948 = vmatmul.mubr.bf16.gmra.mrb[0].mxu0 %v699
    %v949 = vpop.f32.mrb[0].mxu0
    %v950 = vadd.f32 0.0, %v949
    %v951 = vpop.f32.mrb[0].mxu0
    %v952 = vadd.f32 0.0, %v951
    %v953 = vpop.f32.mrb[0].mxu0
    %v954 = vadd.f32 0.0, %v953
    %v955 = vpop.f32.mrb[0].mxu0
    %v956 = vadd.f32 0.0, %v955
    %957 = vmatprep.mubr.bf16.mxu0 %v702
    %958 = vmatmul.mubr.bf16.gmra.mrb[0].mxu0 %v701
    %v959 = vpop.f32.mrb[0].mxu0
    %v960 = vadd.f32 0.0, %v959
    %v961 = vpop.f32.mrb[0].mxu0
    %v962 = vadd.f32 0.0, %v961
    %v963 = vpop.f32.mrb[0].mxu0
    %v964 = vadd.f32 0.0, %v963
    %v965 = vpop.f32.mrb[0].mxu0
    %v966 = vadd.f32 0.0, %v965
    %967 = vmatprep.mubr.bf16.mxu0 %v704
    %968 = vmatmul.mubr.bf16.gmra.mrb[0].mxu0 %v703
    %v969 = vpop.f32.mrb[0].mxu0
    %v970 = vadd.f32 0.0, %v969
    %v971 = vpop.f32.mrb[0].mxu0
    %v972 = vadd.f32 0.0, %v971
    %v973 = vpop.f32.mrb[0].mxu0
    %v974 = vadd.f32 0.0, %v973
    %v975 = vpop.f32.mrb[0].mxu0
    %v976 = vadd.f32 0.0, %v975
    %977 = vdwg.mxu0
    %v978 = vadd.f32 %v449, %v625
    %v979 = vadd.f32 %v450, %v626
    %v980 = vadd.f32 %v451, %v627
    %v981 = vadd.f32 %v452, %v628
    %v982 = vadd.f32 %v453, %v629
    %v983 = vadd.f32 %v454, %v630
    %v984 = vadd.f32 %v455, %v631
    %v985 = vadd.f32 %v456, %v632
    %v986 = vadd.f32 %v457, %v633
    %v987 = vadd.f32 %v458, %v634
    %v988 = vadd.f32 %v459, %v635
    %v989 = vadd.f32 %v460, %v636
    %v990 = vadd.f32 %v461, %v637
    %v991 = vadd.f32 %v462, %v638
    %v992 = vadd.f32 %v463, %v639
    %v993 = vadd.f32 %v464, %v640
    %v994 = vadd.f32 %v465, %v641
    %v995 = vadd.f32 %v466, %v642
    %v996 = vadd.f32 %v467, %v643
    %v997 = vadd.f32 %v468, %v644
    %v998 = vadd.f32 %v469, %v645
    %v999 = vadd.f32 %v470, %v646
    %v1000 = vadd.f32 %v471, %v647
    %v1001 = vadd.f32 %v472, %v648
    %v1002 = vadd.f32 %v473, %v649
    %v1003 = vadd.f32 %v474, %v650
    %v1004 = vadd.f32 %v475, %v651
    %v1005 = vadd.f32 %v476, %v652
    %v1006 = vadd.f32 %v477, %v653
    %v1007 = vadd.f32 %v478, %v654
    %v1008 = vadd.f32 %v479, %v655
    %v1009 = vadd.f32 %v480, %v656
    %v1010 = vld [vmem:[#allocation10] sm:$0xff]
    %v1011 = vld [vmem:[#allocation10 + $0x8] sm:$0xff]
    %v1012 = vld [vmem:[#allocation10 + $0x10] sm:$0xff]
    %v1013 = vld [vmem:[#allocation10 + $0x18] sm:$0xff]
    %v1014 = vld [vmem:[#allocation10 + $0x20] sm:$0xff]
    %v1015 = vld [vmem:[#allocation10 + $0x28] sm:$0xff]
    %v1016 = vld [vmem:[#allocation10 + $0x30] sm:$0xff]
    %v1017 = vld [vmem:[#allocation10 + $0x38] sm:$0xff]
    %v1018 = vld [vmem:[#allocation10 + $0x40] sm:$0xff]
    %v1019 = vld [vmem:[#allocation10 + $0x48] sm:$0xff]
    %v1020 = vld [vmem:[#allocation10 + $0x50] sm:$0xff]
    %v1021 = vld [vmem:[#allocation10 + $0x58] sm:$0xff]
    %v1022 = vld [vmem:[#allocation10 + $0x60] sm:$0xff]
    %v1023 = vld [vmem:[#allocation10 + $0x68] sm:$0xff]
    %v1024 = vld [vmem:[#allocation10 + $0x70] sm:$0xff]
    %v1025 = vld [vmem:[#allocation10 + $0x78] sm:$0xff]
    %v1026 = vld [vmem:[#allocation10 + $0x80] sm:$0xff]
    %v1027 = vld [vmem:[#allocation10 + $0x88] sm:$0xff]
    %v1028 = vld [vmem:[#allocation10 + $0x90] sm:$0xff]
    %v1029 = vld [vmem:[#allocation10 + $0x98] sm:$0xff]
    %v1030 = vld [vmem:[#allocation10 + $0xa0] sm:$0xff]
    %v1031 = vld [vmem:[#allocation10 + $0xa8] sm:$0xff]
    %v1032 = vld [vmem:[#allocation10 + $0xb0] sm:$0xff]
    %v1033 = vld [vmem:[#allocation10 + $0xb8] sm:$0xff]
    %v1034 = vld [vmem:[#allocation10 + $0xc0] sm:$0xff]
    %v1035 = vld [vmem:[#allocation10 + $0xc8] sm:$0xff]
    %v1036 = vld [vmem:[#allocation10 + $0xd0] sm:$0xff]
    %v1037 = vld [vmem:[#allocation10 + $0xd8] sm:$0xff]
    %v1038 = vld [vmem:[#allocation10 + $0xe0] sm:$0xff]
    %v1039 = vld [vmem:[#allocation10 + $0xe8] sm:$0xff]
    %v1040 = vld [vmem:[#allocation10 + $0xf0] sm:$0xff]
    %v1041 = vld [vmem:[#allocation10 + $0xf8] sm:$0xff]
    %v1042 = vpack.c.bf16 %v980, %v978
    %v1043 = vpack.c.bf16 %v981, %v979
    %v1044 = vpack.c.bf16 %v984, %v982
    %v1045 = vpack.c.bf16 %v985, %v983
    %v1046 = vpack.c.bf16 %v988, %v986
    %v1047 = vpack.c.bf16 %v989, %v987
    %v1048 = vpack.c.bf16 %v992, %v990
    %v1049 = vpack.c.bf16 %v993, %v991
    %v1050 = vpack.c.bf16 %v996, %v994
    %v1051 = vpack.c.bf16 %v997, %v995
    %v1052 = vpack.c.bf16 %v1000, %v998
    %v1053 = vpack.c.bf16 %v1001, %v999
    %v1054 = vpack.c.bf16 %v1004, %v1002
    %v1055 = vpack.c.bf16 %v1005, %v1003
    %v1056 = vpack.c.bf16 %v1008, %v1006
    %v1057 = vpack.c.bf16 %v1009, %v1007
    %v1090 = vunpack.c.l.b16 %v1010
    %v1091 = vunpack.c.h.b16 %v1010
    %v1092 = vunpack.c.l.b16 %v1011
    %v1093 = vunpack.c.h.b16 %v1011
    %v1094 = vunpack.c.l.b16 %v1012
    %v1095 = vunpack.c.h.b16 %v1012
    %v1096 = vunpack.c.l.b16 %v1013
    %v1097 = vunpack.c.h.b16 %v1013
    %v1098 = vunpack.c.l.b16 %v1014
    %v1099 = vunpack.c.h.b16 %v1014
    %v1100 = vunpack.c.l.b16 %v1015
    %v1101 = vunpack.c.h.b16 %v1015
    %v1102 = vunpack.c.l.b16 %v1016
    %v1103 = vunpack.c.h.b16 %v1016
    %v1104 = vunpack.c.l.b16 %v1017
    %v1105 = vunpack.c.h.b16 %v1017
    %v1106 = vunpack.c.l.b16 %v1018
    %v1107 = vunpack.c.h.b16 %v1018
    %v1108 = vunpack.c.l.b16 %v1019
    %v1109 = vunpack.c.h.b16 %v1019
    %v1110 = vunpack.c.l.b16 %v1020
    %v1111 = vunpack.c.h.b16 %v1020
    %v1112 = vunpack.c.l.b16 %v1021
    %v1113 = vunpack.c.h.b16 %v1021
    %v1114 = vunpack.c.l.b16 %v1022
    %v1115 = vunpack.c.h.b16 %v1022
    %v1116 = vunpack.c.l.b16 %v1023
    %v1117 = vunpack.c.h.b16 %v1023
    %v1118 = vunpack.c.l.b16 %v1024
    %v1119 = vunpack.c.h.b16 %v1024
    %v1120 = vunpack.c.l.b16 %v1025
    %v1121 = vunpack.c.h.b16 %v1025
    %v1122 = vunpack.c.l.b16 %v1026
    %v1123 = vunpack.c.h.b16 %v1026
    %v1124 = vunpack.c.l.b16 %v1027
    %v1125 = vunpack.c.h.b16 %v1027
    %v1126 = vunpack.c.l.b16 %v1028
    %v1127 = vunpack.c.h.b16 %v1028
    %v1128 = vunpack.c.l.b16 %v1029
    %v1129 = vunpack.c.h.b16 %v1029
    %v1130 = vunpack.c.l.b16 %v1030
    %v1131 = vunpack.c.h.b16 %v1030
    %v1132 = vunpack.c.l.b16 %v1031
    %v1133 = vunpack.c.h.b16 %v1031
    %v1134 = vunpack.c.l.b16 %v1032
    %v1135 = vunpack.c.h.b16 %v1032
    %v1136 = vunpack.c.l.b16 %v1033
    %v1137 = vunpack.c.h.b16 %v1033
    %v1138 = vunpack.c.l.b16 %v1034
    %v1139 = vunpack.c.h.b16 %v1034
    %v1140 = vunpack.c.l.b16 %v1035
    %v1141 = vunpack.c.h.b16 %v1035
    %v1142 = vunpack.c.l.b16 %v1036
    %v1143 = vunpack.c.h.b16 %v1036
    %v1144 = vunpack.c.l.b16 %v1037
    %v1145 = vunpack.c.h.b16 %v1037
    %v1146 = vunpack.c.l.b16 %v1038
    %v1147 = vunpack.c.h.b16 %v1038
    %v1148 = vunpack.c.l.b16 %v1039
    %v1149 = vunpack.c.h.b16 %v1039
    %v1150 = vunpack.c.l.b16 %v1040
    %v1151 = vunpack.c.h.b16 %v1040
    %v1152 = vunpack.c.l.b16 %v1041
    %v1153 = vunpack.c.h.b16 %v1041
    %v1154 = vpack.c.b16 %v1092, %v1090
    %v1155 = vpack.c.b16 %v1093, %v1091
    %v1156 = vpack.c.b16 %v1096, %v1094
    %v1157 = vpack.c.b16 %v1097, %v1095
    %v1158 = vpack.c.b16 %v1100, %v1098
    %v1159 = vpack.c.b16 %v1101, %v1099
    %v1160 = vpack.c.b16 %v1104, %v1102
    %v1161 = vpack.c.b16 %v1105, %v1103
    %v1162 = vpack.c.b16 %v1108, %v1106
    %v1163 = vpack.c.b16 %v1109, %v1107
    %v1164 = vpack.c.b16 %v1112, %v1110
    %v1165 = vpack.c.b16 %v1113, %v1111
    %v1166 = vpack.c.b16 %v1116, %v1114
    %v1167 = vpack.c.b16 %v1117, %v1115
    %v1168 = vpack.c.b16 %v1120, %v1118
    %v1169 = vpack.c.b16 %v1121, %v1119
    %v1170 = vpack.c.b16 %v1124, %v1122
    %v1171 = vpack.c.b16 %v1125, %v1123
    %v1172 = vpack.c.b16 %v1128, %v1126
    %v1173 = vpack.c.b16 %v1129, %v1127
    %v1174 = vpack.c.b16 %v1132, %v1130
    %v1175 = vpack.c.b16 %v1133, %v1131
    %v1176 = vpack.c.b16 %v1136, %v1134
    %v1177 = vpack.c.b16 %v1137, %v1135
    %v1178 = vpack.c.b16 %v1140, %v1138
    %v1179 = vpack.c.b16 %v1141, %v1139
    %v1180 = vpack.c.b16 %v1144, %v1142
    %v1181 = vpack.c.b16 %v1145, %v1143
    %v1182 = vpack.c.b16 %v1148, %v1146
    %v1183 = vpack.c.b16 %v1149, %v1147
    %v1184 = vpack.c.b16 %v1152, %v1150
    %v1185 = vpack.c.b16 %v1153, %v1151
    %1218 = vmatprep.subr.bf16.mxu0 %v1155
    %1219 = vmatpush1.bf16.msra.mxu0 %v1154
    %1220 = vmatprep.subr.bf16.mxu0 %v1157
    %1221 = vmatpush1.bf16.msra.mxu0 %v1156
    %1222 = vmatprep.subr.bf16.mxu0 %v1159
    %1223 = vmatpush1.bf16.msra.mxu0 %v1158
    %1224 = vmatprep.subr.bf16.mxu0 %v1161
    %1225 = vmatpush1.bf16.msra.mxu0 %v1160
    %1226 = vmatprep.subr.bf16.mxu0 %v1163
    %1227 = vmatpush1.bf16.msra.mxu0 %v1162
    %1228 = vmatprep.subr.bf16.mxu0 %v1165
    %1229 = vmatpush1.bf16.msra.mxu0 %v1164
    %1230 = vmatprep.subr.bf16.mxu0 %v1167
    %1231 = vmatpush1.bf16.msra.mxu0 %v1166
    %1232 = vmatprep.subr.bf16.mxu0 %v1169
    %1233 = vmatpush1.bf16.msra.mxu0 %v1168
    %1234 = vmatprep.subr.bf16.mxu0 %v1171
    %1235 = vmatpush1.bf16.msra.mxu0 %v1170
    %1236 = vmatprep.subr.bf16.mxu0 %v1173
    %1237 = vmatpush1.bf16.msra.mxu0 %v1172
    %1238 = vmatprep.subr.bf16.mxu0 %v1175
    %1239 = vmatpush1.bf16.msra.mxu0 %v1174
    %1240 = vmatprep.subr.bf16.mxu0 %v1177
    %1241 = vmatpush1.bf16.msra.mxu0 %v1176
    %1242 = vmatprep.subr.bf16.mxu0 %v1179
    %1243 = vmatpush1.bf16.msra.mxu0 %v1178
    %1244 = vmatprep.subr.bf16.mxu0 %v1181
    %1245 = vmatpush1.bf16.msra.mxu0 %v1180
    %1246 = vmatprep.subr.bf16.mxu0 %v1183
    %1247 = vmatpush1.bf16.msra.mxu0 %v1182
    %1248 = vmatprep.subr.bf16.mxu0 %v1185
    %1249 = vmatpush1.bf16.msra.mxu0 %v1184
    %1250 = vmatprep.mubr.bf16.mxu0 %v1043
    %1251 = vmatmul.mubr.bf16.gmra.mrb[0].mxu0 %v1042
    %v1252 = vpop.f32.mrb[0].mxu0
    %v1253 = vadd.f32 0.0, %v1252
    %v1254 = vpop.f32.mrb[0].mxu0
    %v1255 = vadd.f32 0.0, %v1254
    %v1256 = vpop.f32.mrb[0].mxu0
    %v1257 = vadd.f32 0.0, %v1256
    %v1258 = vpop.f32.mrb[0].mxu0
    %v1259 = vadd.f32 0.0, %v1258
    %1260 = vmatprep.mubr.bf16.mxu0 %v1045
    %1261 = vmatmul.mubr.bf16.gmra.mrb[0].mxu0 %v1044
    %v1262 = vpop.f32.mrb[0].mxu0
    %v1263 = vadd.f32 0.0, %v1262
    %v1264 = vpop.f32.mrb[0].mxu0
    %v1265 = vadd.f32 0.0, %v1264
    %v1266 = vpop.f32.mrb[0].mxu0
    %v1267 = vadd.f32 0.0, %v1266
    %v1268 = vpop.f32.mrb[0].mxu0
    %v1269 = vadd.f32 0.0, %v1268
    %1270 = vmatprep.mubr.bf16.mxu0 %v1047
    %1271 = vmatmul.mubr.bf16.gmra.mrb[0].mxu0 %v1046
    %v1272 = vpop.f32.mrb[0].mxu0
    %v1273 = vadd.f32 0.0, %v1272
    %v1274 = vpop.f32.mrb[0].mxu0
    %v1275 = vadd.f32 0.0, %v1274
    %v1276 = vpop.f32.mrb[0].mxu0
    %v1277 = vadd.f32 0.0, %v1276
    %v1278 = vpop.f32.mrb[0].mxu0
    %v1279 = vadd.f32 0.0, %v1278
    %1280 = vmatprep.mubr.bf16.mxu0 %v1049
    %1281 = vmatmul.mubr.bf16.gmra.mrb[0].mxu0 %v1048
    %v1282 = vpop.f32.mrb[0].mxu0
    %v1283 = vadd.f32 0.0, %v1282
    %v1284 = vpop.f32.mrb[0].mxu0
    %v1285 = vadd.f32 0.0, %v1284
    %v1286 = vpop.f32.mrb[0].mxu0
    %v1287 = vadd.f32 0.0, %v1286
    %v1288 = vpop.f32.mrb[0].mxu0
    %v1289 = vadd.f32 0.0, %v1288
    %1290 = vmatprep.mubr.bf16.mxu0 %v1051
    %1291 = vmatmul.mubr.bf16.gmra.mrb[0].mxu0 %v1050
    %v1292 = vpop.f32.mrb[0].mxu0
    %v1293 = vadd.f32 0.0, %v1292
    %v1294 = vpop.f32.mrb[0].mxu0
    %v1295 = vadd.f32 0.0, %v1294
    %v1296 = vpop.f32.mrb[0].mxu0
    %v1297 = vadd.f32 0.0, %v1296
    %v1298 = vpop.f32.mrb[0].mxu0
    %v1299 = vadd.f32 0.0, %v1298
    %1300 = vmatprep.mubr.bf16.mxu0 %v1053
    %1301 = vmatmul.mubr.bf16.gmra.mrb[0].mxu0 %v1052
    %v1302 = vpop.f32.mrb[0].mxu0
    %v1303 = vadd.f32 0.0, %v1302
    %v1304 = vpop.f32.mrb[0].mxu0
    %v1305 = vadd.f32 0.0, %v1304
    %v1306 = vpop.f32.mrb[0].mxu0
    %v1307 = vadd.f32 0.0, %v1306
    %v1308 = vpop.f32.mrb[0].mxu0
    %v1309 = vadd.f32 0.0, %v1308
    %1310 = vmatprep.mubr.bf16.mxu0 %v1055
    %1311 = vmatmul.mubr.bf16.gmra.mrb[0].mxu0 %v1054
    %v1312 = vpop.f32.mrb[0].mxu0
    %v1313 = vadd.f32 0.0, %v1312
    %v1314 = vpop.f32.mrb[0].mxu0
    %v1315 = vadd.f32 0.0, %v1314
    %v1316 = vpop.f32.mrb[0].mxu0
    %v1317 = vadd.f32 0.0, %v1316
    %v1318 = vpop.f32.mrb[0].mxu0
    %v1319 = vadd.f32 0.0, %v1318
    %1320 = vmatprep.mubr.bf16.mxu0 %v1057
    %1321 = vmatmul.mubr.bf16.gmra.mrb[0].mxu0 %v1056
    %v1322 = vpop.f32.mrb[0].mxu0
    %v1323 = vadd.f32 0.0, %v1322
    %v1324 = vpop.f32.mrb[0].mxu0
    %v1325 = vadd.f32 0.0, %v1324
    %v1326 = vpop.f32.mrb[0].mxu0
    %v1327 = vadd.f32 0.0, %v1326
    %v1328 = vpop.f32.mrb[0].mxu0
    %v1329 = vadd.f32 0.0, %v1328
    %1330 = vdwg.mxu0
    %v1331 = vxor.u32 %v1253, 2147483648
    %v1332 = vxor.u32 %v1255, 2147483648
    %v1333 = vxor.u32 %v1257, 2147483648
    %v1334 = vxor.u32 %v1259, 2147483648
    %v1335 = vxor.u32 %v1263, 2147483648
    %v1336 = vxor.u32 %v1265, 2147483648
    %v1337 = vxor.u32 %v1267, 2147483648
    %v1338 = vxor.u32 %v1269, 2147483648
    %v1339 = vxor.u32 %v1273, 2147483648
    %v1340 = vxor.u32 %v1275, 2147483648
    %v1341 = vxor.u32 %v1277, 2147483648
    %v1342 = vxor.u32 %v1279, 2147483648
    %v1343 = vxor.u32 %v1283, 2147483648
    %v1344 = vxor.u32 %v1285, 2147483648
    %v1345 = vxor.u32 %v1287, 2147483648
    %v1346 = vxor.u32 %v1289, 2147483648
    %v1347 = vxor.u32 %v1293, 2147483648
    %v1348 = vxor.u32 %v1295, 2147483648
    %v1349 = vxor.u32 %v1297, 2147483648
    %v1350 = vxor.u32 %v1299, 2147483648
    %v1351 = vxor.u32 %v1303, 2147483648
    %v1352 = vxor.u32 %v1305, 2147483648
    %v1353 = vxor.u32 %v1307, 2147483648
    %v1354 = vxor.u32 %v1309, 2147483648
    %v1355 = vxor.u32 %v1313, 2147483648
    %v1356 = vxor.u32 %v1315, 2147483648
    %v1357 = vxor.u32 %v1317, 2147483648
    %v1358 = vxor.u32 %v1319, 2147483648
    %v1359 = vxor.u32 %v1323, 2147483648
    %v1360 = vxor.u32 %v1325, 2147483648
    %v1361 = vxor.u32 %v1327, 2147483648
    %v1362 = vxor.u32 %v1329, 2147483648
    %v1363 = vmul.f32 %v1331, 1.442695
    %v1364 = vpow.pop %v1363
    %v1365 = vmul.f32 %v1332, 1.442695
    %v1366 = vpow.pop %v1365
    %v1367 = vmul.f32 %v1333, 1.442695
    %v1368 = vpow.pop %v1367
    %v1369 = vmul.f32 %v1334, 1.442695
    %v1370 = vpow.pop %v1369
    %v1371 = vmul.f32 %v1335, 1.442695
    %v1372 = vpow.pop %v1371
    %v1373 = vmul.f32 %v1336, 1.442695
    %v1374 = vpow.pop %v1373
    %v1375 = vmul.f32 %v1337, 1.442695
    %v1376 = vpow.pop %v1375
    %v1377 = vmul.f32 %v1338, 1.442695
    %v1378 = vpow.pop %v1377
    %v1379 = vmul.f32 %v1339, 1.442695
    %v1380 = vpow.pop %v1379
    %v1381 = vmul.f32 %v1340, 1.442695
    %v1382 = vpow.pop %v1381
    %v1383 = vmul.f32 %v1341, 1.442695
    %v1384 = vpow.pop %v1383
    %v1385 = vmul.f32 %v1342, 1.442695
    %v1386 = vpow.pop %v1385
    %v1387 = vmul.f32 %v1343, 1.442695
    %v1388 = vpow.pop %v1387
    %v1389 = vmul.f32 %v1344, 1.442695
    %v1390 = vpow.pop %v1389
    %v1391 = vmul.f32 %v1345, 1.442695
    %v1392 = vpow.pop %v1391
    %v1393 = vmul.f32 %v1346, 1.442695
    %v1394 = vpow.pop %v1393
    %v1395 = vmul.f32 %v1347, 1.442695
    %v1396 = vpow.pop %v1395
    %v1397 = vmul.f32 %v1348, 1.442695
    %v1398 = vpow.pop %v1397
    %v1399 = vmul.f32 %v1349, 1.442695
    %v1400 = vpow.pop %v1399
    %v1401 = vmul.f32 %v1350, 1.442695
    %v1402 = vpow.pop %v1401
    %v1403 = vmul.f32 %v1351, 1.442695
    %v1404 = vpow.pop %v1403
    %v1405 = vmul.f32 %v1352, 1.442695
    %v1406 = vpow.pop %v1405
    %v1407 = vmul.f32 %v1353, 1.442695
    %v1408 = vpow.pop %v1407
    %v1409 = vmul.f32 %v1354, 1.442695
    %v1410 = vpow.pop %v1409
    %v1411 = vmul.f32 %v1355, 1.442695
    %v1412 = vpow.pop %v1411
    %v1413 = vmul.f32 %v1356, 1.442695
    %v1414 = vpow.pop %v1413
    %v1415 = vmul.f32 %v1357, 1.442695
    %v1416 = vpow.pop %v1415
    %v1417 = vmul.f32 %v1358, 1.442695
    %v1418 = vpow.pop %v1417
    %v1419 = vmul.f32 %v1359, 1.442695
    %v1420 = vpow.pop %v1419
    %v1421 = vmul.f32 %v1360, 1.442695
    %v1422 = vpow.pop %v1421
    %v1423 = vmul.f32 %v1361, 1.442695
    %v1424 = vpow.pop %v1423
    %v1425 = vmul.f32 %v1362, 1.442695
    %v1426 = vpow.pop %v1425
    %v1427 = vadd.f32 %v1364, 1.0
    %v1428 = vadd.f32 %v1366, 1.0
    %v1429 = vadd.f32 %v1368, 1.0
    %v1430 = vadd.f32 %v1370, 1.0
    %v1431 = vadd.f32 %v1372, 1.0
    %v1432 = vadd.f32 %v1374, 1.0
    %v1433 = vadd.f32 %v1376, 1.0
    %v1434 = vadd.f32 %v1378, 1.0
    %v1435 = vadd.f32 %v1380, 1.0
    %v1436 = vadd.f32 %v1382, 1.0
    %v1437 = vadd.f32 %v1384, 1.0
    %v1438 = vadd.f32 %v1386, 1.0
    %v1439 = vadd.f32 %v1388, 1.0
    %v1440 = vadd.f32 %v1390, 1.0
    %v1441 = vadd.f32 %v1392, 1.0
    %v1442 = vadd.f32 %v1394, 1.0
    %v1443 = vadd.f32 %v1396, 1.0
    %v1444 = vadd.f32 %v1398, 1.0
    %v1445 = vadd.f32 %v1400, 1.0
    %v1446 = vadd.f32 %v1402, 1.0
    %v1447 = vadd.f32 %v1404, 1.0
    %v1448 = vadd.f32 %v1406, 1.0
    %v1449 = vadd.f32 %v1408, 1.0
    %v1450 = vadd.f32 %v1410, 1.0
    %v1451 = vadd.f32 %v1412, 1.0
    %v1452 = vadd.f32 %v1414, 1.0
    %v1453 = vadd.f32 %v1416, 1.0
    %v1454 = vadd.f32 %v1418, 1.0
    %v1455 = vadd.f32 %v1420, 1.0
    %v1456 = vadd.f32 %v1422, 1.0
    %v1457 = vadd.f32 %v1424, 1.0
    %v1458 = vadd.f32 %v1426, 1.0
    %v1459 = vrcp.pop %v1427
    %v1460 = vmul.f32 1.0, %v1459
    %v1461 = vrcp.pop %v1428
    %v1462 = vmul.f32 1.0, %v1461
    %v1463 = vrcp.pop %v1429
    %v1464 = vmul.f32 1.0, %v1463
    %v1465 = vrcp.pop %v1430
    %v1466 = vmul.f32 1.0, %v1465
    %v1467 = vrcp.pop %v1431
    %v1468 = vmul.f32 1.0, %v1467
    %v1469 = vrcp.pop %v1432
    %v1470 = vmul.f32 1.0, %v1469
    %v1471 = vrcp.pop %v1433
    %v1472 = vmul.f32 1.0, %v1471
    %v1473 = vrcp.pop %v1434
    %v1474 = vmul.f32 1.0, %v1473
    %v1475 = vrcp.pop %v1435
    %v1476 = vmul.f32 1.0, %v1475
    %v1477 = vrcp.pop %v1436
    %v1478 = vmul.f32 1.0, %v1477
    %v1479 = vrcp.pop %v1437
    %v1480 = vmul.f32 1.0, %v1479
    %v1481 = vrcp.pop %v1438
    %v1482 = vmul.f32 1.0, %v1481
    %v1483 = vrcp.pop %v1439
    %v1484 = vmul.f32 1.0, %v1483
    %v1485 = vrcp.pop %v1440
    %v1486 = vmul.f32 1.0, %v1485
    %v1487 = vrcp.pop %v1441
    %v1488 = vmul.f32 1.0, %v1487
    %v1489 = vrcp.pop %v1442
    %v1490 = vmul.f32 1.0, %v1489
    %v1491 = vrcp.pop %v1443
    %v1492 = vmul.f32 1.0, %v1491
    %v1493 = vrcp.pop %v1444
    %v1494 = vmul.f32 1.0, %v1493
    %v1495 = vrcp.pop %v1445
    %v1496 = vmul.f32 1.0, %v1495
    %v1497 = vrcp.pop %v1446
    %v1498 = vmul.f32 1.0, %v1497
    %v1499 = vrcp.pop %v1447
    %v1500 = vmul.f32 1.0, %v1499
    %v1501 = vrcp.pop %v1448
    %v1502 = vmul.f32 1.0, %v1501
    %v1503 = vrcp.pop %v1449
    %v1504 = vmul.f32 1.0, %v1503
    %v1505 = vrcp.pop %v1450
    %v1506 = vmul.f32 1.0, %v1505
    %v1507 = vrcp.pop %v1451
    %v1508 = vmul.f32 1.0, %v1507
    %v1509 = vrcp.pop %v1452
    %v1510 = vmul.f32 1.0, %v1509
    %v1511 = vrcp.pop %v1453
    %v1512 = vmul.f32 1.0, %v1511
    %v1513 = vrcp.pop %v1454
    %v1514 = vmul.f32 1.0, %v1513
    %v1515 = vrcp.pop %v1455
    %v1516 = vmul.f32 1.0, %v1515
    %v1517 = vrcp.pop %v1456
    %v1518 = vmul.f32 1.0, %v1517
    %v1519 = vrcp.pop %v1457
    %v1520 = vmul.f32 1.0, %v1519
    %v1521 = vrcp.pop %v1458
    %v1522 = vmul.f32 1.0, %v1521
    %v1523 = vmul.f32 %v900, %v1460
    %v1524 = vmul.f32 %v902, %v1462
    %v1525 = vmul.f32 %v904, %v1464
    %v1526 = vmul.f32 %v906, %v1466
    %v1527 = vmul.f32 %v910, %v1468
    %v1528 = vmul.f32 %v912, %v1470
    %v1529 = vmul.f32 %v914, %v1472
    %v1530 = vmul.f32 %v916, %v1474
    %v1531 = vmul.f32 %v920, %v1476
    %v1532 = vmul.f32 %v922, %v1478
    %v1533 = vmul.f32 %v924, %v1480
    %v1534 = vmul.f32 %v926, %v1482
    %v1535 = vmul.f32 %v930, %v1484
    %v1536 = vmul.f32 %v932, %v1486
    %v1537 = vmul.f32 %v934, %v1488
    %v1538 = vmul.f32 %v936, %v1490
    %v1539 = vmul.f32 %v940, %v1492
    %v1540 = vmul.f32 %v942, %v1494
    %v1541 = vmul.f32 %v944, %v1496
    %v1542 = vmul.f32 %v946, %v1498
    %v1543 = vmul.f32 %v950, %v1500
    %v1544 = vmul.f32 %v952, %v1502
    %v1545 = vmul.f32 %v954, %v1504
    %v1546 = vmul.f32 %v956, %v1506
    %v1547 = vmul.f32 %v960, %v1508
    %v1548 = vmul.f32 %v962, %v1510
    %v1549 = vmul.f32 %v964, %v1512
    %v1550 = vmul.f32 %v966, %v1514
    %v1551 = vmul.f32 %v970, %v1516
    %v1552 = vmul.f32 %v972, %v1518
    %v1553 = vmul.f32 %v974, %v1520
    %v1554 = vmul.f32 %v976, %v1522
    %v1555 = vld [vmem:[#allocation11] sm:$0xff]
    %v1556 = vld [vmem:[#allocation11 + $0x8] sm:$0xff]
    %v1557 = vld [vmem:[#allocation11 + $0x10] sm:$0xff]
    %v1558 = vld [vmem:[#allocation11 + $0x18] sm:$0xff]
    %v1559 = vld [vmem:[#allocation11 + $0x20] sm:$0xff]
    %v1560 = vld [vmem:[#allocation11 + $0x28] sm:$0xff]
    %v1561 = vld [vmem:[#allocation11 + $0x30] sm:$0xff]
    %v1562 = vld [vmem:[#allocation11 + $0x38] sm:$0xff]
    %v1563 = vld [vmem:[#allocation11 + $0x40] sm:$0xff]
    %v1564 = vld [vmem:[#allocation11 + $0x48] sm:$0xff]
    %v1565 = vld [vmem:[#allocation11 + $0x50] sm:$0xff]
    %v1566 = vld [vmem:[#allocation11 + $0x58] sm:$0xff]
    %v1567 = vld [vmem:[#allocation11 + $0x60] sm:$0xff]
    %v1568 = vld [vmem:[#allocation11 + $0x68] sm:$0xff]
    %v1569 = vld [vmem:[#allocation11 + $0x70] sm:$0xff]
    %v1570 = vld [vmem:[#allocation11 + $0x78] sm:$0xff]
    %v1571 = vld [vmem:[#allocation11 + $0x80] sm:$0xff]
    %v1572 = vld [vmem:[#allocation11 + $0x88] sm:$0xff]
    %v1573 = vld [vmem:[#allocation11 + $0x90] sm:$0xff]
    %v1574 = vld [vmem:[#allocation11 + $0x98] sm:$0xff]
    %v1575 = vld [vmem:[#allocation11 + $0xa0] sm:$0xff]
    %v1576 = vld [vmem:[#allocation11 + $0xa8] sm:$0xff]
    %v1577 = vld [vmem:[#allocation11 + $0xb0] sm:$0xff]
    %v1578 = vld [vmem:[#allocation11 + $0xb8] sm:$0xff]
    %v1579 = vld [vmem:[#allocation11 + $0xc0] sm:$0xff]
    %v1580 = vld [vmem:[#allocation11 + $0xc8] sm:$0xff]
    %v1581 = vld [vmem:[#allocation11 + $0xd0] sm:$0xff]
    %v1582 = vld [vmem:[#allocation11 + $0xd8] sm:$0xff]
    %v1583 = vld [vmem:[#allocation11 + $0xe0] sm:$0xff]
    %v1584 = vld [vmem:[#allocation11 + $0xe8] sm:$0xff]
    %v1585 = vld [vmem:[#allocation11 + $0xf0] sm:$0xff]
    %v1586 = vld [vmem:[#allocation11 + $0xf8] sm:$0xff]
    %v1587 = vpack.c.bf16 %v1525, %v1523
    %v1588 = vpack.c.bf16 %v1526, %v1524
    %v1589 = vpack.c.bf16 %v1529, %v1527
    %v1590 = vpack.c.bf16 %v1530, %v1528
    %v1591 = vpack.c.bf16 %v1533, %v1531
    %v1592 = vpack.c.bf16 %v1534, %v1532
    %v1593 = vpack.c.bf16 %v1537, %v1535
    %v1594 = vpack.c.bf16 %v1538, %v1536
    %v1595 = vpack.c.bf16 %v1541, %v1539
    %v1596 = vpack.c.bf16 %v1542, %v1540
    %v1597 = vpack.c.bf16 %v1545, %v1543
    %v1598 = vpack.c.bf16 %v1546, %v1544
    %v1599 = vpack.c.bf16 %v1549, %v1547
    %v1600 = vpack.c.bf16 %v1550, %v1548
    %v1601 = vpack.c.bf16 %v1553, %v1551
    %v1602 = vpack.c.bf16 %v1554, %v1552
    %v1603 = vld [vmem:[%s6] sm:$0x3]
    %v1605 = vlaneseq
    %v1606 = vshrl.u32 %v1605, 7
    %v1607 = vsub.s32 0, %v1606
    %v1608 = vrot.slane %v1603, %v1607
    %v1609 = vlaneseq
    %v1610 = vshrl.u32 %v1609, 7
    %v1611 = vsub.s32 1, %v1610
    %v1612 = vrot.slane %v1603, %v1611
    %v1647 = vunpack.c.l.b16 %v1555
    %v1648 = vunpack.c.h.b16 %v1555
    %v1649 = vunpack.c.l.b16 %v1556
    %v1650 = vunpack.c.h.b16 %v1556
    %v1651 = vunpack.c.l.b16 %v1557
    %v1652 = vunpack.c.h.b16 %v1557
    %v1653 = vunpack.c.l.b16 %v1558
    %v1654 = vunpack.c.h.b16 %v1558
    %v1655 = vunpack.c.l.b16 %v1559
    %v1656 = vunpack.c.h.b16 %v1559
    %v1657 = vunpack.c.l.b16 %v1560
    %v1658 = vunpack.c.h.b16 %v1560
    %v1659 = vunpack.c.l.b16 %v1561
    %v1660 = vunpack.c.h.b16 %v1561
    %v1661 = vunpack.c.l.b16 %v1562
    %v1662 = vunpack.c.h.b16 %v1562
    %v1663 = vunpack.c.l.b16 %v1563
    %v1664 = vunpack.c.h.b16 %v1563
    %v1665 = vunpack.c.l.b16 %v1564
    %v1666 = vunpack.c.h.b16 %v1564
    %v1667 = vunpack.c.l.b16 %v1565
    %v1668 = vunpack.c.h.b16 %v1565
    %v1669 = vunpack.c.l.b16 %v1566
    %v1670 = vunpack.c.h.b16 %v1566
    %v1671 = vunpack.c.l.b16 %v1567
    %v1672 = vunpack.c.h.b16 %v1567
    %v1673 = vunpack.c.l.b16 %v1568
    %v1674 = vunpack.c.h.b16 %v1568
    %v1675 = vunpack.c.l.b16 %v1569
    %v1676 = vunpack.c.h.b16 %v1569
    %v1677 = vunpack.c.l.b16 %v1570
    %v1678 = vunpack.c.h.b16 %v1570
    %v1679 = vunpack.c.l.b16 %v1571
    %v1680 = vunpack.c.h.b16 %v1571
    %v1681 = vunpack.c.l.b16 %v1572
    %v1682 = vunpack.c.h.b16 %v1572
    %v1683 = vunpack.c.l.b16 %v1573
    %v1684 = vunpack.c.h.b16 %v1573
    %v1685 = vunpack.c.l.b16 %v1574
    %v1686 = vunpack.c.h.b16 %v1574
    %v1687 = vunpack.c.l.b16 %v1575
    %v1688 = vunpack.c.h.b16 %v1575
    %v1689 = vunpack.c.l.b16 %v1576
    %v1690 = vunpack.c.h.b16 %v1576
    %v1691 = vunpack.c.l.b16 %v1577
    %v1692 = vunpack.c.h.b16 %v1577
    %v1693 = vunpack.c.l.b16 %v1578
    %v1694 = vunpack.c.h.b16 %v1578
    %v1695 = vunpack.c.l.b16 %v1579
    %v1696 = vunpack.c.h.b16 %v1579
    %v1697 = vunpack.c.l.b16 %v1580
    %v1698 = vunpack.c.h.b16 %v1580
    %v1699 = vunpack.c.l.b16 %v1581
    %v1700 = vunpack.c.h.b16 %v1581
    %v1701 = vunpack.c.l.b16 %v1582
    %v1702 = vunpack.c.h.b16 %v1582
    %v1703 = vunpack.c.l.b16 %v1583
    %v1704 = vunpack.c.h.b16 %v1583
    %v1705 = vunpack.c.l.b16 %v1584
    %v1706 = vunpack.c.h.b16 %v1584
    %v1707 = vunpack.c.l.b16 %v1585
    %v1708 = vunpack.c.h.b16 %v1585
    %v1709 = vunpack.c.l.b16 %v1586
    %v1710 = vunpack.c.h.b16 %v1586
    %v1711 = vpack.c.b16 %v1649, %v1647
    %v1712 = vpack.c.b16 %v1650, %v1648
    %v1713 = vpack.c.b16 %v1653, %v1651
    %v1714 = vpack.c.b16 %v1654, %v1652
    %v1715 = vpack.c.b16 %v1657, %v1655
    %v1716 = vpack.c.b16 %v1658, %v1656
    %v1717 = vpack.c.b16 %v1661, %v1659
    %v1718 = vpack.c.b16 %v1662, %v1660
    %v1719 = vpack.c.b16 %v1665, %v1663
    %v1720 = vpack.c.b16 %v1666, %v1664
    %v1721 = vpack.c.b16 %v1669, %v1667
    %v1722 = vpack.c.b16 %v1670, %v1668
    %v1723 = vpack.c.b16 %v1673, %v1671
    %v1724 = vpack.c.b16 %v1674, %v1672
    %v1725 = vpack.c.b16 %v1677, %v1675
    %v1726 = vpack.c.b16 %v1678, %v1676
    %v1727 = vpack.c.b16 %v1681, %v1679
    %v1728 = vpack.c.b16 %v1682, %v1680
    %v1729 = vpack.c.b16 %v1685, %v1683
    %v1730 = vpack.c.b16 %v1686, %v1684
    %v1731 = vpack.c.b16 %v1689, %v1687
    %v1732 = vpack.c.b16 %v1690, %v1688
    %v1733 = vpack.c.b16 %v1693, %v1691
    %v1734 = vpack.c.b16 %v1694, %v1692
    %v1735 = vpack.c.b16 %v1697, %v1695
    %v1736 = vpack.c.b16 %v1698, %v1696
    %v1737 = vpack.c.b16 %v1701, %v1699
    %v1738 = vpack.c.b16 %v1702, %v1700
    %v1739 = vpack.c.b16 %v1705, %v1703
    %v1740 = vpack.c.b16 %v1706, %v1704
    %v1741 = vpack.c.b16 %v1709, %v1707
    %v1742 = vpack.c.b16 %v1710, %v1708
    %1775 = vmatprep.subr.bf16.mxu0 %v1712
    %1776 = vmatpush1.bf16.msra.mxu0 %v1711
    %1777 = vmatprep.subr.bf16.mxu0 %v1714
    %1778 = vmatpush1.bf16.msra.mxu0 %v1713
    %1779 = vmatprep.subr.bf16.mxu0 %v1716
    %1780 = vmatpush1.bf16.msra.mxu0 %v1715
    %1781 = vmatprep.subr.bf16.mxu0 %v1718
    %1782 = vmatpush1.bf16.msra.mxu0 %v1717
    %1783 = vmatprep.subr.bf16.mxu0 %v1720
    %1784 = vmatpush1.bf16.msra.mxu0 %v1719
    %1785 = vmatprep.subr.bf16.mxu0 %v1722
    %1786 = vmatpush1.bf16.msra.mxu0 %v1721
    %1787 = vmatprep.subr.bf16.mxu0 %v1724
    %1788 = vmatpush1.bf16.msra.mxu0 %v1723
    %1789 = vmatprep.subr.bf16.mxu0 %v1726
    %1790 = vmatpush1.bf16.msra.mxu0 %v1725
    %1791 = vmatprep.subr.bf16.mxu0 %v1728
    %1792 = vmatpush1.bf16.msra.mxu0 %v1727
    %1793 = vmatprep.subr.bf16.mxu0 %v1730
    %1794 = vmatpush1.bf16.msra.mxu0 %v1729
    %1795 = vmatprep.subr.bf16.mxu0 %v1732
    %1796 = vmatpush1.bf16.msra.mxu0 %v1731
    %1797 = vmatprep.subr.bf16.mxu0 %v1734
    %1798 = vmatpush1.bf16.msra.mxu0 %v1733
    %1799 = vmatprep.subr.bf16.mxu0 %v1736
    %1800 = vmatpush1.bf16.msra.mxu0 %v1735
    %1801 = vmatprep.subr.bf16.mxu0 %v1738
    %1802 = vmatpush1.bf16.msra.mxu0 %v1737
    %1803 = vmatprep.subr.bf16.mxu0 %v1740
    %1804 = vmatpush1.bf16.msra.mxu0 %v1739
    %1805 = vmatprep.subr.bf16.mxu0 %v1742
    %1806 = vmatpush1.bf16.msra.mxu0 %v1741
    %1807 = vmatprep.mubr.bf16.mxu0 %v1588
    %1808 = vmatmul.mubr.bf16.gmra.mrb[0].mxu0 %v1587
    %v1809 = vpop.f32.mrb[0].mxu0
    %v1810 = vadd.f32 %v1608, %v1809
    %v1811 = vpop.f32.mrb[0].mxu0
    %v1812 = vadd.f32 %v1612, %v1811
    %v1813 = vpop.f32.mrb[0].mxu0
    %v1814 = vadd.f32 %v1608, %v1813
    %v1815 = vpop.f32.mrb[0].mxu0
    %v1816 = vadd.f32 %v1612, %v1815
    %1817 = vmatprep.mubr.bf16.mxu0 %v1590
    %1818 = vmatmul.mubr.bf16.gmra.mrb[0].mxu0 %v1589
    %v1819 = vpop.f32.mrb[0].mxu0
    %v1820 = vadd.f32 %v1608, %v1819
    %v1821 = vpop.f32.mrb[0].mxu0
    %v1822 = vadd.f32 %v1612, %v1821
    %v1823 = vpop.f32.mrb[0].mxu0
    %v1824 = vadd.f32 %v1608, %v1823
    %v1825 = vpop.f32.mrb[0].mxu0
    %v1826 = vadd.f32 %v1612, %v1825
    %1827 = vmatprep.mubr.bf16.mxu0 %v1592
    %1828 = vmatmul.mubr.bf16.gmra.mrb[0].mxu0 %v1591
    %v1829 = vpop.f32.mrb[0].mxu0
    %v1830 = vadd.f32 %v1608, %v1829
    %v1831 = vpop.f32.mrb[0].mxu0
    %v1832 = vadd.f32 %v1612, %v1831
    %v1833 = vpop.f32.mrb[0].mxu0
    %v1834 = vadd.f32 %v1608, %v1833
    %v1835 = vpop.f32.mrb[0].mxu0
    %v1836 = vadd.f32 %v1612, %v1835
    %1837 = vmatprep.mubr.bf16.mxu0 %v1594
    %1838 = vmatmul.mubr.bf16.gmra.mrb[0].mxu0 %v1593
    %v1839 = vpop.f32.mrb[0].mxu0
    %v1840 = vadd.f32 %v1608, %v1839
    %v1841 = vpop.f32.mrb[0].mxu0
    %v1842 = vadd.f32 %v1612, %v1841
    %v1843 = vpop.f32.mrb[0].mxu0
    %v1844 = vadd.f32 %v1608, %v1843
    %v1845 = vpop.f32.mrb[0].mxu0
    %v1846 = vadd.f32 %v1612, %v1845
    %1847 = vmatprep.mubr.bf16.mxu0 %v1596
    %1848 = vmatmul.mubr.bf16.gmra.mrb[0].mxu0 %v1595
    %v1849 = vpop.f32.mrb[0].mxu0
    %v1850 = vadd.f32 %v1608, %v1849
    %v1851 = vpop.f32.mrb[0].mxu0
    %v1852 = vadd.f32 %v1612, %v1851
    %v1853 = vpop.f32.mrb[0].mxu0
    %v1854 = vadd.f32 %v1608, %v1853
    %v1855 = vpop.f32.mrb[0].mxu0
    %v1856 = vadd.f32 %v1612, %v1855
    %1857 = vmatprep.mubr.bf16.mxu0 %v1598
    %1858 = vmatmul.mubr.bf16.gmra.mrb[0].mxu0 %v1597
    %v1859 = vpop.f32.mrb[0].mxu0
    %v1860 = vadd.f32 %v1608, %v1859
    %v1861 = vpop.f32.mrb[0].mxu0
    %v1862 = vadd.f32 %v1612, %v1861
    %v1863 = vpop.f32.mrb[0].mxu0
    %v1864 = vadd.f32 %v1608, %v1863
    %v1865 = vpop.f32.mrb[0].mxu0
    %v1866 = vadd.f32 %v1612, %v1865
    %1867 = vmatprep.mubr.bf16.mxu0 %v1600
    %1868 = vmatmul.mubr.bf16.gmra.mrb[0].mxu0 %v1599
    %v1869 = vpop.f32.mrb[0].mxu0
    %v1870 = vadd.f32 %v1608, %v1869
    %v1871 = vpop.f32.mrb[0].mxu0
    %v1872 = vadd.f32 %v1612, %v1871
    %v1873 = vpop.f32.mrb[0].mxu0
    %v1874 = vadd.f32 %v1608, %v1873
    %v1875 = vpop.f32.mrb[0].mxu0
    %v1876 = vadd.f32 %v1612, %v1875
    %1877 = vmatprep.mubr.bf16.mxu0 %v1602
    %1878 = vmatmul.mubr.bf16.gmra.mrb[0].mxu0 %v1601
    %v1879 = vpop.f32.mrb[0].mxu0
    %v1880 = vadd.f32 %v1608, %v1879
    %v1881 = vpop.f32.mrb[0].mxu0
    %v1882 = vadd.f32 %v1612, %v1881
    %v1883 = vpop.f32.mrb[0].mxu0
    %v1884 = vadd.f32 %v1608, %v1883
    %v1885 = vpop.f32.mrb[0].mxu0
    %v1886 = vadd.f32 %v1612, %v1885
    %1887 = vdwg.mxu0
    %v1888 = vmax.f32 %v1810, 0.0
    %v1889 = vmax.f32 %v1812, 0.0
    %v1890 = vmax.f32 %v1814, 0.0
    %v1891 = vmax.f32 %v1816, 0.0
    %v1892 = vmax.f32 %v1820, 0.0
    %v1893 = vmax.f32 %v1822, 0.0
    %v1894 = vmax.f32 %v1824, 0.0
    %v1895 = vmax.f32 %v1826, 0.0
    %v1896 = vmax.f32 %v1830, 0.0
    %v1897 = vmax.f32 %v1832, 0.0
    %v1898 = vmax.f32 %v1834, 0.0
    %v1899 = vmax.f32 %v1836, 0.0
    %v1900 = vmax.f32 %v1840, 0.0
    %v1901 = vmax.f32 %v1842, 0.0
    %v1902 = vmax.f32 %v1844, 0.0
    %v1903 = vmax.f32 %v1846, 0.0
    %v1904 = vmax.f32 %v1850, 0.0
    %v1905 = vmax.f32 %v1852, 0.0
    %v1906 = vmax.f32 %v1854, 0.0
    %v1907 = vmax.f32 %v1856, 0.0
    %v1908 = vmax.f32 %v1860, 0.0
    %v1909 = vmax.f32 %v1862, 0.0
    %v1910 = vmax.f32 %v1864, 0.0
    %v1911 = vmax.f32 %v1866, 0.0
    %v1912 = vmax.f32 %v1870, 0.0
    %v1913 = vmax.f32 %v1872, 0.0
    %v1914 = vmax.f32 %v1874, 0.0
    %v1915 = vmax.f32 %v1876, 0.0
    %v1916 = vmax.f32 %v1880, 0.0
    %v1917 = vmax.f32 %v1882, 0.0
    %v1918 = vmax.f32 %v1884, 0.0
    %v1919 = vmax.f32 %v1886, 0.0
    %v1920 = vld [vmem:[#allocation13] sm:$0xf]
    %v1921 = vld [vmem:[#allocation13 + $0x4] sm:$0xf]
    %v1922 = vld [vmem:[#allocation13 + $0x8] sm:$0xf]
    %v1923 = vld [vmem:[#allocation13 + $0xc] sm:$0xf]
    %v1924 = vld [vmem:[#allocation13 + $0x10] sm:$0xf]
    %v1925 = vld [vmem:[#allocation13 + $0x14] sm:$0xf]
    %v1926 = vld [vmem:[#allocation13 + $0x18] sm:$0xf]
    %v1927 = vld [vmem:[#allocation13 + $0x1c] sm:$0xf]
    %v1928 = vld [vmem:[#allocation13 + $0x20] sm:$0xf]
    %v1929 = vld [vmem:[#allocation13 + $0x24] sm:$0xf]
    %v1930 = vld [vmem:[#allocation13 + $0x28] sm:$0xf]
    %v1931 = vld [vmem:[#allocation13 + $0x2c] sm:$0xf]
    %v1932 = vld [vmem:[#allocation13 + $0x30] sm:$0xf]
    %v1933 = vld [vmem:[#allocation13 + $0x34] sm:$0xf]
    %v1934 = vld [vmem:[#allocation13 + $0x38] sm:$0xf]
    %v1935 = vld [vmem:[#allocation13 + $0x3c] sm:$0xf]
    %v1936 = vld [vmem:[#allocation13 + $0x40] sm:$0xf]
    %v1937 = vld [vmem:[#allocation13 + $0x44] sm:$0xf]
    %v1938 = vld [vmem:[#allocation13 + $0x48] sm:$0xf]
    %v1939 = vld [vmem:[#allocation13 + $0x4c] sm:$0xf]
    %v1940 = vld [vmem:[#allocation13 + $0x50] sm:$0xf]
    %v1941 = vld [vmem:[#allocation13 + $0x54] sm:$0xf]
    %v1942 = vld [vmem:[#allocation13 + $0x58] sm:$0xf]
    %v1943 = vld [vmem:[#allocation13 + $0x5c] sm:$0xf]
    %v1944 = vld [vmem:[#allocation13 + $0x60] sm:$0xf]
    %v1945 = vld [vmem:[#allocation13 + $0x64] sm:$0xf]
    %v1946 = vld [vmem:[#allocation13 + $0x68] sm:$0xf]
    %v1947 = vld [vmem:[#allocation13 + $0x6c] sm:$0xf]
    %v1948 = vld [vmem:[#allocation13 + $0x70] sm:$0xf]
    %v1949 = vld [vmem:[#allocation13 + $0x74] sm:$0xf]
    %v1950 = vld [vmem:[#allocation13 + $0x78] sm:$0xf]
    %v1951 = vld [vmem:[#allocation13 + $0x7c] sm:$0xf]
    %v1952 = vpack.c.bf16 %v1890, %v1888
    %v1953 = vpack.c.bf16 %v1891, %v1889
    %v1954 = vpack.c.bf16 %v1894, %v1892
    %v1955 = vpack.c.bf16 %v1895, %v1893
    %v1956 = vpack.c.bf16 %v1898, %v1896
    %v1957 = vpack.c.bf16 %v1899, %v1897
    %v1958 = vpack.c.bf16 %v1902, %v1900
    %v1959 = vpack.c.bf16 %v1903, %v1901
    %v1960 = vpack.c.bf16 %v1906, %v1904
    %v1961 = vpack.c.bf16 %v1907, %v1905
    %v1962 = vpack.c.bf16 %v1910, %v1908
    %v1963 = vpack.c.bf16 %v1911, %v1909
    %v1964 = vpack.c.bf16 %v1914, %v1912
    %v1965 = vpack.c.bf16 %v1915, %v1913
    %v1966 = vpack.c.bf16 %v1918, %v1916
    %v1967 = vpack.c.bf16 %v1919, %v1917
    %v1968 = vld [vmem:[%s8] sm:$0x1]
    %v1970 = vlaneseq
    %v1971 = vshrl.u32 %v1970, 7
    %v1972 = vsub.s32 0, %v1971
    %v1973 = vrot.slane %v1968, %v1972
    %v2007 = vunpack.c.l.b16 %v1920
    %v2008 = vunpack.c.l.b16 %v1921
    %v2009 = vunpack.c.l.b16 %v1922
    %v2010 = vunpack.c.l.b16 %v1923
    %v2011 = vunpack.c.l.b16 %v1924
    %v2012 = vunpack.c.l.b16 %v1925
    %v2013 = vunpack.c.l.b16 %v1926
    %v2014 = vunpack.c.l.b16 %v1927
    %v2015 = vunpack.c.l.b16 %v1928
    %v2016 = vunpack.c.l.b16 %v1929
    %v2017 = vunpack.c.l.b16 %v1930
    %v2018 = vunpack.c.l.b16 %v1931
    %v2019 = vunpack.c.l.b16 %v1932
    %v2020 = vunpack.c.l.b16 %v1933
    %v2021 = vunpack.c.l.b16 %v1934
    %v2022 = vunpack.c.l.b16 %v1935
    %v2023 = vunpack.c.l.b16 %v1936
    %v2024 = vunpack.c.l.b16 %v1937
    %v2025 = vunpack.c.l.b16 %v1938
    %v2026 = vunpack.c.l.b16 %v1939
    %v2027 = vunpack.c.l.b16 %v1940
    %v2028 = vunpack.c.l.b16 %v1941
    %v2029 = vunpack.c.l.b16 %v1942
    %v2030 = vunpack.c.l.b16 %v1943
    %v2031 = vunpack.c.l.b16 %v1944
    %v2032 = vunpack.c.l.b16 %v1945
    %v2033 = vunpack.c.l.b16 %v1946
    %v2034 = vunpack.c.l.b16 %v1947
    %v2035 = vunpack.c.l.b16 %v1948
    %v2036 = vunpack.c.l.b16 %v1949
    %v2037 = vunpack.c.l.b16 %v1950
    %v2038 = vunpack.c.l.b16 %v1951
    %v2039 = vpack.c.b16 %v2008, %v2007
    %v2040 = vpack.c.b16 %v2010, %v2009
    %v2041 = vpack.c.b16 %v2012, %v2011
    %v2042 = vpack.c.b16 %v2014, %v2013
    %v2043 = vpack.c.b16 %v2016, %v2015
    %v2044 = vpack.c.b16 %v2018, %v2017
    %v2045 = vpack.c.b16 %v2020, %v2019
    %v2046 = vpack.c.b16 %v2022, %v2021
    %v2047 = vpack.c.b16 %v2024, %v2023
    %v2048 = vpack.c.b16 %v2026, %v2025
    %v2049 = vpack.c.b16 %v2028, %v2027
    %v2050 = vpack.c.b16 %v2030, %v2029
    %v2051 = vpack.c.b16 %v2032, %v2031
    %v2052 = vpack.c.b16 %v2034, %v2033
    %v2053 = vpack.c.b16 %v2036, %v2035
    %v2054 = vpack.c.b16 %v2038, %v2037
    %2071 = vmatprep.subr.bf16.mxu0 0
    %2072 = vmatpush1.bf16.msra.mxu0 %v2039
    %2073 = vmatprep.subr.bf16.mxu0 0
    %2074 = vmatpush1.bf16.msra.mxu0 %v2040
    %2075 = vmatprep.subr.bf16.mxu0 0
    %2076 = vmatpush1.bf16.msra.mxu0 %v2041
    %2077 = vmatprep.subr.bf16.mxu0 0
    %2078 = vmatpush1.bf16.msra.mxu0 %v2042
    %2079 = vmatprep.subr.bf16.mxu0 0
    %2080 = vmatpush1.bf16.msra.mxu0 %v2043
    %2081 = vmatprep.subr.bf16.mxu0 0
    %2082 = vmatpush1.bf16.msra.mxu0 %v2044
    %2083 = vmatprep.subr.bf16.mxu0 0
    %2084 = vmatpush1.bf16.msra.mxu0 %v2045
    %2085 = vmatprep.subr.bf16.mxu0 0
    %2086 = vmatpush1.bf16.msra.mxu0 %v2046
    %2087 = vmatprep.subr.bf16.mxu0 0
    %2088 = vmatpush1.bf16.msra.mxu0 %v2047
    %2089 = vmatprep.subr.bf16.mxu0 0
    %2090 = vmatpush1.bf16.msra.mxu0 %v2048
    %2091 = vmatprep.subr.bf16.mxu0 0
    %2092 = vmatpush1.bf16.msra.mxu0 %v2049
    %2093 = vmatprep.subr.bf16.mxu0 0
    %2094 = vmatpush1.bf16.msra.mxu0 %v2050
    %2095 = vmatprep.subr.bf16.mxu0 0
    %2096 = vmatpush1.bf16.msra.mxu0 %v2051
    %2097 = vmatprep.subr.bf16.mxu0 0
    %2098 = vmatpush1.bf16.msra.mxu0 %v2052
    %2099 = vmatprep.subr.bf16.mxu0 0
    %2100 = vmatpush1.bf16.msra.mxu0 %v2053
    %2101 = vmatprep.subr.bf16.mxu0 0
    %2102 = vmatpush1.bf16.msra.mxu0 %v2054
    %2103 = vmatprep.mubr.bf16.mxu0 %v1953
    %2104 = vmatmul.mubr.bf16.gmra.mrb[0].mxu0 %v1952
    %v2105 = vpop.f32.mrb[0].mxu0
    %v2106 = vadd.f32 %v1973, %v2105
    %v2107 = vpop.f32.mrb[0].mxu0
    %v2108 = vpop.f32.mrb[0].mxu0
    %v2109 = vadd.f32 %v1973, %v2108
    %v2110 = vpop.f32.mrb[0].mxu0
    %2111 = vmatprep.mubr.bf16.mxu0 %v1955
    %2112 = vmatmul.mubr.bf16.gmra.mrb[0].mxu0 %v1954
    %v2113 = vpop.f32.mrb[0].mxu0
    %v2114 = vadd.f32 %v1973, %v2113
    %v2115 = vpop.f32.mrb[0].mxu0
    %v2116 = vpop.f32.mrb[0].mxu0
    %v2117 = vadd.f32 %v1973, %v2116
    %v2118 = vpop.f32.mrb[0].mxu0
    %2119 = vmatprep.mubr.bf16.mxu0 %v1957
    %2120 = vmatmul.mubr.bf16.gmra.mrb[0].mxu0 %v1956
    %v2121 = vpop.f32.mrb[0].mxu0
    %v2122 = vadd.f32 %v1973, %v2121
    %v2123 = vpop.f32.mrb[0].mxu0
    %v2124 = vpop.f32.mrb[0].mxu0
    %v2125 = vadd.f32 %v1973, %v2124
    %v2126 = vpop.f32.mrb[0].mxu0
    %2127 = vmatprep.mubr.bf16.mxu0 %v1959
    %2128 = vmatmul.mubr.bf16.gmra.mrb[0].mxu0 %v1958
    %v2129 = vpop.f32.mrb[0].mxu0
    %v2130 = vadd.f32 %v1973, %v2129
    %v2131 = vpop.f32.mrb[0].mxu0
    %v2132 = vpop.f32.mrb[0].mxu0
    %v2133 = vadd.f32 %v1973, %v2132
    %v2134 = vpop.f32.mrb[0].mxu0
    %2135 = vmatprep.mubr.bf16.mxu0 %v1961
    %2136 = vmatmul.mubr.bf16.gmra.mrb[0].mxu0 %v1960
    %v2137 = vpop.f32.mrb[0].mxu0
    %v2138 = vadd.f32 %v1973, %v2137
    %v2139 = vpop.f32.mrb[0].mxu0
    %v2140 = vpop.f32.mrb[0].mxu0
    %v2141 = vadd.f32 %v1973, %v2140
    %v2142 = vpop.f32.mrb[0].mxu0
    %2143 = vmatprep.mubr.bf16.mxu0 %v1963
    %2144 = vmatmul.mubr.bf16.gmra.mrb[0].mxu0 %v1962
    %v2145 = vpop.f32.mrb[0].mxu0
    %v2146 = vadd.f32 %v1973, %v2145
    %v2147 = vpop.f32.mrb[0].mxu0
    %v2148 = vpop.f32.mrb[0].mxu0
    %v2149 = vadd.f32 %v1973, %v2148
    %v2150 = vpop.f32.mrb[0].mxu0
    %2151 = vmatprep.mubr.bf16.mxu0 %v1965
    %2152 = vmatmul.mubr.bf16.gmra.mrb[0].mxu0 %v1964
    %v2153 = vpop.f32.mrb[0].mxu0
    %v2154 = vadd.f32 %v1973, %v2153
    %v2155 = vpop.f32.mrb[0].mxu0
    %v2156 = vpop.f32.mrb[0].mxu0
    %v2157 = vadd.f32 %v1973, %v2156
    %v2158 = vpop.f32.mrb[0].mxu0
    %2159 = vmatprep.mubr.bf16.mxu0 %v1967
    %2160 = vmatmul.mubr.bf16.gmra.mrb[0].mxu0 %v1966
    %v2161 = vpop.f32.mrb[0].mxu0
    %v2162 = vadd.f32 %v1973, %v2161
    %v2163 = vpop.f32.mrb[0].mxu0
    %v2164 = vpop.f32.mrb[0].mxu0
    %v2165 = vadd.f32 %v1973, %v2164
    %v2166 = vpop.f32.mrb[0].mxu0
    %2167 = vdwg.mxu0
    %2168 = vadd.xlane.f32.xlu0 %v2106
    %v2169 = vpop.xlane.xlu0 %2168
    %2170 = vadd.xlane.f32.xlu0 %v2109
    %v2171 = vpop.xlane.xlu0 %2170
    %2172 = vadd.xlane.f32.xlu0 %v2114
    %v2173 = vpop.xlane.xlu0 %2172
    %2174 = vadd.xlane.f32.xlu0 %v2117
    %v2175 = vpop.xlane.xlu0 %2174
    %2176 = vadd.xlane.f32.xlu0 %v2122
    %v2177 = vpop.xlane.xlu0 %2176
    %2178 = vadd.xlane.f32.xlu0 %v2125
    %v2179 = vpop.xlane.xlu0 %2178
    %2180 = vadd.xlane.f32.xlu0 %v2130
    %v2181 = vpop.xlane.xlu0 %2180
    %2182 = vadd.xlane.f32.xlu0 %v2133
    %v2183 = vpop.xlane.xlu0 %2182
    %2184 = vadd.xlane.f32.xlu0 %v2138
    %v2185 = vpop.xlane.xlu0 %2184
    %2186 = vadd.xlane.f32.xlu0 %v2141
    %v2187 = vpop.xlane.xlu0 %2186
    %2188 = vadd.xlane.f32.xlu0 %v2146
    %v2189 = vpop.xlane.xlu0 %2188
    %2190 = vadd.xlane.f32.xlu0 %v2149
    %v2191 = vpop.xlane.xlu0 %2190
    %2192 = vadd.xlane.f32.xlu0 %v2154
    %v2193 = vpop.xlane.xlu0 %2192
    %2194 = vadd.xlane.f32.xlu0 %v2157
    %v2195 = vpop.xlane.xlu0 %2194
    %2196 = vadd.xlane.f32.xlu0 %v2162
    %v2197 = vpop.xlane.xlu0 %2196
    %2198 = vadd.xlane.f32.xlu0 %v2165
    %v2199 = vpop.xlane.xlu0 %2198
    %v2200 = vrcp.pop 128.0
    %v2201 = vmul.f32 %v2169, %v2200
    %v2202 = vmul.f32 %v2171, %v2200
    %v2203 = vmul.f32 %v2173, %v2200
    %v2204 = vmul.f32 %v2175, %v2200
    %v2205 = vmul.f32 %v2177, %v2200
    %v2206 = vmul.f32 %v2179, %v2200
    %v2207 = vmul.f32 %v2181, %v2200
    %v2208 = vmul.f32 %v2183, %v2200
    %v2209 = vmul.f32 %v2185, %v2200
    %v2210 = vmul.f32 %v2187, %v2200
    %v2211 = vmul.f32 %v2189, %v2200
    %v2212 = vmul.f32 %v2191, %v2200
    %v2213 = vmul.f32 %v2193, %v2200
    %v2214 = vmul.f32 %v2195, %v2200
    %v2215 = vmul.f32 %v2197, %v2200
    %v2216 = vmul.f32 %v2199, %v2200
    %v2217 = vsub.f32 %v2106, %v2201
    %v2218 = vsub.f32 %v2109, %v2202
    %v2219 = vsub.f32 %v2114, %v2203
    %v2220 = vsub.f32 %v2117, %v2204
    %v2221 = vsub.f32 %v2122, %v2205
    %v2222 = vsub.f32 %v2125, %v2206
    %v2223 = vsub.f32 %v2130, %v2207
    %v2224 = vsub.f32 %v2133, %v2208
    %v2225 = vsub.f32 %v2138, %v2209
    %v2226 = vsub.f32 %v2141, %v2210
    %v2227 = vsub.f32 %v2146, %v2211
    %v2228 = vsub.f32 %v2149, %v2212
    %v2229 = vsub.f32 %v2154, %v2213
    %v2230 = vsub.f32 %v2157, %v2214
    %v2231 = vsub.f32 %v2162, %v2215
    %v2232 = vsub.f32 %v2165, %v2216
    %v2233 = vmul.f32 %v2217, %v2217
    %v2234 = vmul.f32 %v2218, %v2218
    %v2235 = vmul.f32 %v2219, %v2219
    %v2236 = vmul.f32 %v2220, %v2220
    %v2237 = vmul.f32 %v2221, %v2221
    %v2238 = vmul.f32 %v2222, %v2222
    %v2239 = vmul.f32 %v2223, %v2223
    %v2240 = vmul.f32 %v2224, %v2224
    %v2241 = vmul.f32 %v2225, %v2225
    %v2242 = vmul.f32 %v2226, %v2226
    %v2243 = vmul.f32 %v2227, %v2227
    %v2244 = vmul.f32 %v2228, %v2228
    %v2245 = vmul.f32 %v2229, %v2229
    %v2246 = vmul.f32 %v2230, %v2230
    %v2247 = vmul.f32 %v2231, %v2231
    %v2248 = vmul.f32 %v2232, %v2232
    %2249 = vadd.xlane.f32.xlu0 %v2233
    %v2250 = vpop.xlane.xlu0 %2249
    %2251 = vadd.xlane.f32.xlu0 %v2234
    %v2252 = vpop.xlane.xlu0 %2251
    %2253 = vadd.xlane.f32.xlu0 %v2235
    %v2254 = vpop.xlane.xlu0 %2253
    %2255 = vadd.xlane.f32.xlu0 %v2236
    %v2256 = vpop.xlane.xlu0 %2255
    %2257 = vadd.xlane.f32.xlu0 %v2237
    %v2258 = vpop.xlane.xlu0 %2257
    %2259 = vadd.xlane.f32.xlu0 %v2238
    %v2260 = vpop.xlane.xlu0 %2259
    %2261 = vadd.xlane.f32.xlu0 %v2239
    %v2262 = vpop.xlane.xlu0 %2261
    %2263 = vadd.xlane.f32.xlu0 %v2240
    %v2264 = vpop.xlane.xlu0 %2263
    %2265 = vadd.xlane.f32.xlu0 %v2241
    %v2266 = vpop.xlane.xlu0 %2265
    %2267 = vadd.xlane.f32.xlu0 %v2242
    %v2268 = vpop.xlane.xlu0 %2267
    %2269 = vadd.xlane.f32.xlu0 %v2243
    %v2270 = vpop.xlane.xlu0 %2269
    %2271 = vadd.xlane.f32.xlu0 %v2244
    %v2272 = vpop.xlane.xlu0 %2271
    %2273 = vadd.xlane.f32.xlu0 %v2245
    %v2274 = vpop.xlane.xlu0 %2273
    %2275 = vadd.xlane.f32.xlu0 %v2246
    %v2276 = vpop.xlane.xlu0 %2275
    %2277 = vadd.xlane.f32.xlu0 %v2247
    %v2278 = vpop.xlane.xlu0 %2277
    %2279 = vadd.xlane.f32.xlu0 %v2248
    %v2280 = vpop.xlane.xlu0 %2279
    %v2281 = vmul.f32 %v2250, %v2200
    %v2282 = vmul.f32 %v2252, %v2200
    %v2283 = vmul.f32 %v2254, %v2200
    %v2284 = vmul.f32 %v2256, %v2200
    %v2285 = vmul.f32 %v2258, %v2200
    %v2286 = vmul.f32 %v2260, %v2200
    %v2287 = vmul.f32 %v2262, %v2200
    %v2288 = vmul.f32 %v2264, %v2200
    %v2289 = vmul.f32 %v2266, %v2200
    %v2290 = vmul.f32 %v2268, %v2200
    %v2291 = vmul.f32 %v2270, %v2200
    %v2292 = vmul.f32 %v2272, %v2200
    %v2293 = vmul.f32 %v2274, %v2200
    %v2294 = vmul.f32 %v2276, %v2200
    %v2295 = vmul.f32 %v2278, %v2200
    %v2296 = vmul.f32 %v2280, %v2200
    %v2297 = vadd.f32 %v2281, 1e-05
    %v2298 = vadd.f32 %v2282, 1e-05
    %v2299 = vadd.f32 %v2283, 1e-05
    %v2300 = vadd.f32 %v2284, 1e-05
    %v2301 = vadd.f32 %v2285, 1e-05
    %v2302 = vadd.f32 %v2286, 1e-05
    %v2303 = vadd.f32 %v2287, 1e-05
    %v2304 = vadd.f32 %v2288, 1e-05
    %v2305 = vadd.f32 %v2289, 1e-05
    %v2306 = vadd.f32 %v2290, 1e-05
    %v2307 = vadd.f32 %v2291, 1e-05
    %v2308 = vadd.f32 %v2292, 1e-05
    %v2309 = vadd.f32 %v2293, 1e-05
    %v2310 = vadd.f32 %v2294, 1e-05
    %v2311 = vadd.f32 %v2295, 1e-05
    %v2312 = vadd.f32 %v2296, 1e-05
    %v2313 = vrsqrt.pop %v2297
    %v2314 = vrsqrt.pop %v2298
    %v2315 = vrsqrt.pop %v2299
    %v2316 = vrsqrt.pop %v2300
    %v2317 = vrsqrt.pop %v2301
    %v2318 = vrsqrt.pop %v2302
    %v2319 = vrsqrt.pop %v2303
    %v2320 = vrsqrt.pop %v2304
    %v2321 = vrsqrt.pop %v2305
    %v2322 = vrsqrt.pop %v2306
    %v2323 = vrsqrt.pop %v2307
    %v2324 = vrsqrt.pop %v2308
    %v2325 = vrsqrt.pop %v2309
    %v2326 = vrsqrt.pop %v2310
    %v2327 = vrsqrt.pop %v2311
    %v2328 = vrsqrt.pop %v2312
    %v2329 = vmul.f32 %v2217, %v2313
    %v2330 = vmul.f32 %v2218, %v2314
    %v2331 = vmul.f32 %v2219, %v2315
    %v2332 = vmul.f32 %v2220, %v2316
    %v2333 = vmul.f32 %v2221, %v2317
    %v2334 = vmul.f32 %v2222, %v2318
    %v2335 = vmul.f32 %v2223, %v2319
    %v2336 = vmul.f32 %v2224, %v2320
    %v2337 = vmul.f32 %v2225, %v2321
    %v2338 = vmul.f32 %v2226, %v2322
    %v2339 = vmul.f32 %v2227, %v2323
    %v2340 = vmul.f32 %v2228, %v2324
    %v2341 = vmul.f32 %v2229, %v2325
    %v2342 = vmul.f32 %v2230, %v2326
    %v2343 = vmul.f32 %v2231, %v2327
    %v2344 = vmul.f32 %v2232, %v2328
    %2345 = vst [vmem:[#allocation14] sm:$0xff] %v2329
    %2346 = vst [vmem:[#allocation14 + $0x8] sm:$0xff] %v2330
    %2347 = vst [vmem:[#allocation14 + $0x10] sm:$0xff] %v2331
    %2348 = vst [vmem:[#allocation14 + $0x18] sm:$0xff] %v2332
    %2349 = vst [vmem:[#allocation14 + $0x20] sm:$0xff] %v2333
    %2350 = vst [vmem:[#allocation14 + $0x28] sm:$0xff] %v2334
    %2351 = vst [vmem:[#allocation14 + $0x30] sm:$0xff] %v2335
    %2352 = vst [vmem:[#allocation14 + $0x38] sm:$0xff] %v2336
    %2353 = vst [vmem:[#allocation14 + $0x40] sm:$0xff] %v2337
    %2354 = vst [vmem:[#allocation14 + $0x48] sm:$0xff] %v2338
    %2355 = vst [vmem:[#allocation14 + $0x50] sm:$0xff] %v2339
    %2356 = vst [vmem:[#allocation14 + $0x58] sm:$0xff] %v2340
    %2357 = vst [vmem:[#allocation14 + $0x60] sm:$0xff] %v2341
    %2358 = vst [vmem:[#allocation14 + $0x68] sm:$0xff] %v2342
    %2359 = vst [vmem:[#allocation14 + $0x70] sm:$0xff] %v2343
    %2360 = vst [vmem:[#allocation14 + $0x78] sm:$0xff] %v2344
    // Predicated region
    $region66: #{tpu_custom_call.1} parent=1 // pred_check
      _
    $region67: #{tpu_custom_call.1} parent=1 // pred_check_branch
      %2362 = sbr.rel (0) target = $region69
    $region68: #{tpu_custom_call.1} parent=1 // pred_region
      %s2364 = ssub.s32 2048, 2048
      %2365 = vsyncadd [#allocation4], %s2364
      %s2366 = sshll.u32 [#allocation14], 4
      %s2367 = int_to_ptr.vmem [resolvable:$true] %s2366
      %2372 = dma.vmem_to_hbm [thread:$0]  %s2367, 2048, %s9, [#allocation4], 128, 128, 8
    $region69: #{tpu_custom_call.1} parent=1 // pred_fallthru
      _
    // Predicated region
    $region70: #{tpu_custom_call.1} parent=1 // pred_check
      _
    $region71: #{tpu_custom_call.1} parent=1 // pred_check_branch
      %2374 = sbr.rel (0) target = $region73
    $region72: #{tpu_custom_call.1} parent=1 // pred_region
      %2375 = dma.done [#allocation4], 2048
    $region73: #{tpu_custom_call.1} parent=1 // pred_fallthru
      _
    %2376 = vsyncpa [#allocation3], 1
    %2377 = vsyncpa [#allocation6], 1
    %2378 = vsyncpa [#allocation9], 1
    %2379 = vsyncpa [#allocation12], 1
    %2380 = vsyncpa [#allocation4], 1

</llo_original>
